<compile_context>
chip_gen: v7x
topology: tpu7x:2x2x1
jax: 0.10.0
libtpu: 0.0.40
codegen_flags: <defaults>
</compile_context>

<pallas_src>
import jax
import jax.numpy as jnp
from jax.experimental import pallas as pl
from jax.experimental.pallas import tpu as pltpu

EPS = 1e-6


def _supra_kernel(cumg_ref, x_ref, wqk_ref, bqk_ref, wv_ref, bv_ref, y_ref):
    f32 = jnp.float32
    bf16 = jnp.bfloat16
    x = x_ref[...]                                      # (Bb, T, D) f32
    Bb, T, D = x.shape
    cumg = cumg_ref[...]                                # (T, T) host-precomputed decay cumsum

    # Fused q/k projection on a 2-D (Bb*T, D) LHS: one MXU matmul (bf16 operands,
    # f32 accumulate) + bias + ReLU.
    x2 = x.reshape(Bb * T, D)                           # layout-preserving merge (T % 8 == 0)
    proj = jnp.dot(x2.astype(bf16), wqk_ref[...],       # wqk_ref is bf16 (D, 2D)
                   preferred_element_type=f32) + bqk_ref[...]
    proj = jnp.maximum(proj, 0.0)                       # (Bb*T, 2D) f32
    q = proj[:, :D].reshape(Bb, T, D)                   # (Bb, T, D)
    k = proj[:, D:].reshape(Bb, T, D)                   # (Bb, T, D)

    # Diagonal of the V projection only, with j landing on the LANE axis:
    # vdiag[b,j] = <x[b,j,:], W_v[j,:]> + b_v[j].  VPU multiply + XLU lane reduce.
    vdiag = jnp.sum(x * wv_ref[...], axis=-1) + bv_ref[...]      # (Bb, T)

    # Single batched Gram matrix on the MXU (bf16 operands, f32 accumulation).
    gram = jnp.einsum('btd,bsd->bts', q.astype(bf16), k.astype(bf16),
                      preferred_element_type=f32)                # (Bb, T, T)

    gc = gram * cumg                                             # (Bb, T, T)
    denom = jnp.sum(gc, axis=-1, keepdims=True) + EPS            # (Bb, T, 1), >= EPS
    inv = 1.0 / denom                                            # exact; tiny tensor
    y_ref[...] = gc * vdiag[:, None, :] * inv


def _pick_batch_block(batch, want):
    bb = max(1, min(want, batch))
    while batch % bb:
        bb -= 1
    return bb


def supra_parallel_fixed_gamma(x, w_q, b_q, w_k, b_k, w_v, b_v, gamma, *, batch_block=None):
    B, T, D = x.shape
    assert T == D, "reference einsum 'ij,bjdj->bidj' requires T == D"
    f32 = jnp.float32
    if batch_block is None:
        # Two grid steps: keeps both v7x TensorCores busy ("parallel" axis) and
        # costs only one extra ~0.35us pipeline step on single-TC v5e/v6e.
        batch_block = max(1, B // 2)
    bb = _pick_batch_block(B, batch_block)

    # Host-side constants: cumulative decay matrix and packed/transposed weights.
    idx = jnp.arange(T, dtype=f32)
    exps = jnp.maximum(idx[None, :] - idx[:, None], 0.0)
    gamma_powers = jnp.power(jnp.asarray(gamma, f32), exps)           # (T, T)
    cumg = jnp.cumsum(gamma_powers, axis=0)                           # (T, T)

    w_qk_t = jnp.concatenate([w_q.T, w_k.T], axis=1).astype(jnp.bfloat16)  # (D, 2D): x @ Wqk
    b_qk = jnp.concatenate([b_q, b_k])[None, :].astype(f32)                # (1, 2D)
    w_v_f = w_v.astype(f32)                                                # (T, D), rows = out feats
    b_v_r = b_v[None, :].astype(f32)                                       # (1, T), j on lanes

    def const_spec(shape):
        return pl.BlockSpec(shape, lambda i: tuple(0 for _ in shape))

    out = pl.pallas_call(
        _supra_kernel,
        out_shape=jax.ShapeDtypeStruct((B, T, T), f32),
        grid=(B // bb,),
        in_specs=[
            const_spec((T, T)),                                    # cumG
            pl.BlockSpec((bb, T, D), lambda i: (i, 0, 0)),         # x (batch block)
            const_spec((D, 2 * D)),                                # [W_q^T | W_k^T] (bf16)
            const_spec((1, 2 * D)),                                # [b_q | b_k]
            const_spec((T, D)),                                    # W_v
            const_spec((1, T)),                                    # b_v as a lane row
        ],
        out_specs=pl.BlockSpec((bb, T, T), lambda i: (i, 0, 0)),
        compiler_params=pltpu.CompilerParams(dimension_semantics=("parallel",)),
    )(cumg, x.astype(f32), w_qk_t, b_qk, w_v_f, b_v_r)
    return out


def ref_forward(x, w_q, b_q, w_k, b_k, w_v, b_v, gamma, eps=EPS):
    """Pure-JAX transcription of the PyTorch reference (for validation)."""
    B, T, D = x.shape
    q = jax.nn.relu(x @ w_q.T + b_q)
    k = jax.nn.relu(x @ w_k.T + b_k)
    v = x @ w_v.T + b_v
    kv = jnp.einsum('bti,btj->btij', k, v)
    ge = jnp.maximum(jnp.arange(T)[None, :] - jnp.arange(T)[:, None], 0).astype(jnp.float32)
    gp = gamma ** ge
    decayed_k = jnp.einsum('ij,bjd->bid', gp, k)
    kv_diag = jnp.diagonal(kv, axis1=1, axis2=3)              # (B, D, T): kv[b, j, d, j]
    decayed_kv = jnp.einsum('ij,bdj->bidj', gp, kv_diag)      # == 'ij,bjdj->bidj'
    S = jnp.cumsum(decayed_kv, axis=1)
    Z = jnp.cumsum(decayed_k, axis=1)
    num = jnp.einsum('bti,btij->btj', q, S)
    denom = jnp.einsum('bti,bti->bt', q, Z)[..., None] + eps
    return num / denom


if __name__ == "__main__":
    # T must equal D (see note above); B=32 -> grid of 2 blocks of 16 (Bb*T = 256 MXU rows).
    B, T, D = 32, 16, 16
    key = jax.random.PRNGKey(0)
    ks = jax.random.split(key, 7)
    scale = 1.0 / jnp.sqrt(jnp.float32(D))

    x = jax.random.normal(ks[0], (B, T, D), dtype=jnp.float32)
    w_q = jax.random.uniform(ks[1], (D, D), minval=-scale, maxval=scale, dtype=jnp.float32)
    b_q = jax.random.uniform(ks[2], (D,), minval=-scale, maxval=scale, dtype=jnp.float32)
    w_k = jax.random.uniform(ks[3], (D, D), minval=-scale, maxval=scale, dtype=jnp.float32)
    b_k = jax.random.uniform(ks[4], (D,), minval=-scale, maxval=scale, dtype=jnp.float32)
    w_v = jax.random.uniform(ks[5], (D, D), minval=-scale, maxval=scale, dtype=jnp.float32)
    b_v = jax.random.uniform(ks[6], (D,), minval=-scale, maxval=scale, dtype=jnp.float32)
    gamma = jnp.float32(0.9)          # nn.Parameter(torch.tensor(0.9)), fixed init

    y = supra_parallel_fixed_gamma(x, w_q, b_q, w_k, b_k, w_v, b_v, gamma)
    y = jax.block_until_ready(y)

    y_ref = ref_forward(x, w_q, b_q, w_k, b_k, w_v, b_v, gamma)
    assert y.shape == (B, T, D), y.shape
    max_err = float(jnp.max(jnp.abs(y - y_ref)))
    # Tolerance covers bf16 MXU operands (f32 accumulation, K=16 -> ~1% rel error)
    # plus f32 re-association in the matmul-based cumsum fold.
    assert jnp.allclose(y, y_ref, rtol=2e-2, atol=2e-3), f"max abs err {max_err}"
    print("KERNEL_OK")
</pallas_src>

<mosaic_0001>
module attributes {stable_mosaic.version = 11 : i64} {
  func.func @_supra_kernel(%arg0: i32, %arg1: memref<16x16xf32, #tpu.memory_space<vmem>>, %arg2: memref<16x16x16xf32, #tpu.memory_space<vmem>>, %arg3: memref<16x32xbf16, #tpu.memory_space<vmem>>, %arg4: memref<1x32xf32, #tpu.memory_space<vmem>>, %arg5: memref<16x16xf32, #tpu.memory_space<vmem>>, %arg6: memref<1x16xf32, #tpu.memory_space<vmem>>, %arg7: memref<16x16x16xf32, #tpu.memory_space<vmem>>) attributes {dimension_semantics = [#tpu.dimension_semantics<parallel>], iteration_bounds = array<i64: 2>, scalar_prefetch = 0 : i64, scratch_operands = 0 : i64, tpu.core_type = #tpu.core_type<tc>, window_params = [{pipeline_mode = #tpu.pipeline_mode<synchronous>, transform_indices = @transform_0, window_bounds = array<i64: 16, 16>}, {transform_indices = @transform_1, window_bounds = array<i64: 16, 16, 16>}, {pipeline_mode = #tpu.pipeline_mode<synchronous>, transform_indices = @transform_2, window_bounds = array<i64: 16, 32>}, {pipeline_mode = #tpu.pipeline_mode<synchronous>, transform_indices = @transform_3, window_bounds = array<i64: 1, 32>}, {pipeline_mode = #tpu.pipeline_mode<synchronous>, transform_indices = @transform_4, window_bounds = array<i64: 16, 16>}, {pipeline_mode = #tpu.pipeline_mode<synchronous>, transform_indices = @transform_5, window_bounds = array<i64: 1, 16>}, {transform_indices = @transform_6, window_bounds = array<i64: 16, 16, 16>}]} {
    %c0 = arith.constant 0 : index
    %c0_0 = arith.constant 0 : index
    %c0_1 = arith.constant 0 : index
    %0 = vector.load %arg2[%c0, %c0_0, %c0_1] : memref<16x16x16xf32, #tpu.memory_space<vmem>>, vector<16x16x16xf32>
    %c0_2 = arith.constant 0 : index
    %c0_3 = arith.constant 0 : index
    %1 = vector.load %arg1[%c0_2, %c0_3] : memref<16x16xf32, #tpu.memory_space<vmem>>, vector<16x16xf32>
    %2 = vector.shape_cast %0 : vector<16x16x16xf32> to vector<256x16xf32>
    %3 = arith.truncf %2 : vector<256x16xf32> to vector<256x16xbf16>
    %c0_4 = arith.constant 0 : index
    %c0_5 = arith.constant 0 : index
    %4 = vector.load %arg3[%c0_4, %c0_5] : memref<16x32xbf16, #tpu.memory_space<vmem>>, vector<16x32xbf16>
    %cst = arith.constant dense<0.000000e+00> : vector<256x32xf32>
    %5 = tpu.matmul %3, %4, %cst {dimension_numbers = #tpu.dot_dimension_numbers<[1], [0], [0], [1], [0, 0, 1, 1], [], []>} : vector<256x16xbf16>, vector<16x32xbf16>, vector<256x32xf32> -> vector<256x32xf32>
    %c0_6 = arith.constant 0 : index
    %c0_7 = arith.constant 0 : index
    %6 = vector.load %arg4[%c0_6, %c0_7] : memref<1x32xf32, #tpu.memory_space<vmem>>, vector<1x32xf32>
    %7 = vector.broadcast %6 : vector<1x32xf32> to vector<256x32xf32>
    %8 = arith.addf %5, %7 : vector<256x32xf32>
    %cst_8 = arith.constant 0.000000e+00 : f32
    %9 = vector.broadcast %cst_8 : f32 to vector<256x32xf32>
    %10 = arith.maximumf %8, %9 : vector<256x32xf32>
    %11 = vector.extract_strided_slice %10 {offsets = [0, 0], sizes = [256, 16], strides = [1, 1]} : vector<256x32xf32> to vector<256x16xf32>
    %12 = vector.shape_cast %11 : vector<256x16xf32> to vector<16x16x16xf32>
    %13 = vector.extract_strided_slice %10 {offsets = [0, 16], sizes = [256, 16], strides = [1, 1]} : vector<256x32xf32> to vector<256x16xf32>
    %14 = vector.shape_cast %13 : vector<256x16xf32> to vector<16x16x16xf32>
    %c0_9 = arith.constant 0 : index
    %c0_10 = arith.constant 0 : index
    %15 = vector.load %arg5[%c0_9, %c0_10] : memref<16x16xf32, #tpu.memory_space<vmem>>, vector<16x16xf32>
    %16 = vector.shape_cast %15 : vector<16x16xf32> to vector<1x16x16xf32>
    %17 = vector.broadcast %16 : vector<1x16x16xf32> to vector<16x16x16xf32>
    %18 = arith.mulf %0, %17 : vector<16x16x16xf32>
    %cst_11 = arith.constant dense<0.000000e+00> : vector<16x16xf32>
    %19 = vector.multi_reduction <add>, %18, %cst_11 [2] : vector<16x16x16xf32> to vector<16x16xf32>
    %c0_12 = arith.constant 0 : index
    %c0_13 = arith.constant 0 : index
    %20 = vector.load %arg6[%c0_12, %c0_13] : memref<1x16xf32, #tpu.memory_space<vmem>>, vector<1x16xf32>
    %21 = vector.broadcast %20 : vector<1x16xf32> to vector<16x16xf32>
    %22 = arith.addf %19, %21 : vector<16x16xf32>
    %23 = arith.truncf %12 : vector<16x16x16xf32> to vector<16x16x16xbf16>
    %24 = arith.truncf %14 : vector<16x16x16xf32> to vector<16x16x16xbf16>
    "tpu.trace_start"() <{level = 10 : i32, message = "btd,bsd->bts"}> : () -> ()
    %cst_14 = arith.constant dense<0.000000e+00> : vector<16x16x16xf32>
    %25 = tpu.matmul %23, %24, %cst_14 {dimension_numbers = #tpu.dot_dimension_numbers<[2], [2], [1], [1], [0, 0, 0, 1, 1, 1], [0], [0]>} : vector<16x16x16xbf16>, vector<16x16x16xbf16>, vector<16x16x16xf32> -> vector<16x16x16xf32>
    "tpu.trace_stop"() : () -> ()
    %26 = vector.shape_cast %1 : vector<16x16xf32> to vector<1x16x16xf32>
    %27 = vector.broadcast %26 : vector<1x16x16xf32> to vector<16x16x16xf32>
    %28 = arith.mulf %25, %27 : vector<16x16x16xf32>
    %cst_15 = arith.constant dense<0.000000e+00> : vector<16x16xf32>
    %29 = vector.multi_reduction <add>, %28, %cst_15 [2] : vector<16x16x16xf32> to vector<16x16xf32>
    %30 = vector.shape_cast %29 : vector<16x16xf32> to vector<16x16x1xf32>
    %cst_16 = arith.constant 9.99999997E-7 : f32
    %31 = vector.broadcast %cst_16 : f32 to vector<16x16x1xf32>
    %32 = arith.addf %30, %31 : vector<16x16x1xf32>
    %cst_17 = arith.constant 1.000000e+00 : f32
    %33 = vector.broadcast %cst_17 : f32 to vector<16x16x1xf32>
    %34 = arith.divf %33, %32 : vector<16x16x1xf32>
    %35 = vector.shape_cast %22 : vector<16x16xf32> to vector<16x1x16xf32>
    %36 = vector.broadcast %35 : vector<16x1x16xf32> to vector<16x16x16xf32>
    %37 = arith.mulf %28, %36 : vector<16x16x16xf32>
    %38 = vector.broadcast %34 : vector<16x16x1xf32> to vector<16x16x16xf32>
    %39 = arith.mulf %37, %38 : vector<16x16x16xf32>
    %c0_18 = arith.constant 0 : index
    %c0_19 = arith.constant 0 : index
    %c0_20 = arith.constant 0 : index
    %40 = vector.load %arg7[%c0_18, %c0_19, %c0_20] : memref<16x16x16xf32, #tpu.memory_space<vmem>>, vector<16x16x16xf32>
    tpu.vector_store %arg7[%c0_18, %c0_19, %c0_20], %39 {strides = array<i32>} : memref<16x16x16xf32, #tpu.memory_space<vmem>>, vector<16x16x16xf32>,
    return
  }
  func.func @transform_0(%arg0: i32) -> (i32, i32) {
    %c0_i32 = arith.constant 0 : i32
    %c0_i32_0 = arith.constant 0 : i32
    %c0_i32_1 = arith.constant 0 : i32
    return %c0_i32, %c0_i32_0 : i32, i32
  }
  func.func @transform_1(%arg0: i32) -> (i32, i32, i32) {
    %c0_i32 = arith.constant 0 : i32
    %c0_i32_0 = arith.constant 0 : i32
    %c0_i32_1 = arith.constant 0 : i32
    return %arg0, %c0_i32, %c0_i32_0 : i32, i32, i32
  }
  func.func @transform_2(%arg0: i32) -> (i32, i32) {
    %c0_i32 = arith.constant 0 : i32
    %c0_i32_0 = arith.constant 0 : i32
    %c0_i32_1 = arith.constant 0 : i32
    return %c0_i32, %c0_i32_0 : i32, i32
  }
  func.func @transform_3(%arg0: i32) -> (i32, i32) {
    %c0_i32 = arith.constant 0 : i32
    %c0_i32_0 = arith.constant 0 : i32
    %c0_i32_1 = arith.constant 0 : i32
    return %c0_i32, %c0_i32_0 : i32, i32
  }
  func.func @transform_4(%arg0: i32) -> (i32, i32) {
    %c0_i32 = arith.constant 0 : i32
    %c0_i32_0 = arith.constant 0 : i32
    %c0_i32_1 = arith.constant 0 : i32
    return %c0_i32, %c0_i32_0 : i32, i32
  }
  func.func @transform_5(%arg0: i32) -> (i32, i32) {
    %c0_i32 = arith.constant 0 : i32
    %c0_i32_0 = arith.constant 0 : i32
    %c0_i32_1 = arith.constant 0 : i32
    return %c0_i32, %c0_i32_0 : i32, i32
  }
  func.func @transform_6(%arg0: i32) -> (i32, i32, i32) {
    %c0_i32 = arith.constant 0 : i32
    %c0_i32_0 = arith.constant 0 : i32
    %c0_i32_1 = arith.constant 0 : i32
    return %arg0, %c0_i32, %c0_i32_0 : i32, i32, i32
  }
}

</mosaic_0001>

<llo_original>
// kernel: tpu_custom_call.1
$region0: #{tpu_custom_call.1}
  #allocation0 [shape = 'u32[]', space=smem, size = 0x4, offset = 0x4, fixed_abs, tag = 'smem constant byte address 0x4 - core index']
  #allocation1 [shape = 'u32[144,128]{1,0:T(1,128)}', space=vmem, size = 0x12000, scoped, tag = 'internal scratch']
  %s0 = inlined_call_operand.vmem [shape: f32[16,16], index: 0, kind: input, shape index: {}]
  %s1 = inlined_call_operand.vmem [shape: f32[32,16,16], index: 1, kind: input, shape index: {}]
  %s2 = inlined_call_operand.vmem [shape: bf16[16,32], index: 2, kind: input, shape index: {}]
  %s3 = inlined_call_operand.vmem [shape: f32[1,32], index: 3, kind: input, shape index: {}]
  %s4 = inlined_call_operand.vmem [shape: f32[16,16], index: 4, kind: input, shape index: {}]
  %s5 = inlined_call_operand.vmem [shape: f32[1,16], index: 5, kind: input, shape index: {}]
  %s6 = inlined_call_operand.vmem [shape: f32[32,16,16], index: 6, kind: output, shape index: {}]
  %s7 = sld [smem:[#allocation0]]
  $region57: #{tpu_custom_call.1} parent=0
    _
  %s9 = ssub.s32 1, %s7
  %s10 = scalar_select 0, %s9, %s7
  loop: start=0, step=1, limit=4
  $region2: #{tpu_custom_call.1} parent=0 // loop_pre_header
    _
  $region3: #{tpu_custom_call.1} parent=0 // loop_header
    %s12 = sphi 0, %s16
    %p13 = scmp.ge.s32.totalorder %s12, 4
    %s20 = sphi 0, %s20
    %s22 = sphi 0, %s20
    %s23 = sphi 0, %s22
    %s37 = sphi 0, %s23
    %s43 = sphi 0, %s45
    %s46 = sphi 0, %s43
    %s47 = sphi 0, %s46
    %s63 = sphi 0, %s47
    %s67 = sphi 0, %s67
    %s69 = sphi 0, %s67
    %s70 = sphi 0, %s69
    %s84 = sphi 0, %s70
    %s88 = sphi 0, %s88
    %s90 = sphi 0, %s88
    %s91 = sphi 0, %s90
    %s105 = sphi 0, %s91
    %s109 = sphi 0, %s109
    %s111 = sphi 0, %s109
    %s112 = sphi 0, %s111
    %s126 = sphi 0, %s112
    %s130 = sphi 0, %s130
    %s132 = sphi 0, %s130
    %s133 = sphi 0, %s132
    %s147 = sphi 0, %s133
    %s153 = sphi 0, %s155
    %s156 = sphi 0, %s153
    %s157 = sphi 0, %s156
    %s173 = sphi 0, %s157
  $region4: #{tpu_custom_call.1} parent=0 // loop_header_branch
    %15 = sbr.rel (%p13) target = $region8
  $region5: #{tpu_custom_call.1} parent=0 // loop_body
    %s17 = ssub.s32 %s12, 1
    %s18 = ssub.s32 %s12, 2
    %s19 = sadd.s32 %s12, 1
    %s21 = sadd.s32 %s20, 1
    %p24 = scmp.eq.s32.totalorder %s12, 1
    %p25 = scmp.ne.s32.totalorder %s20, %s22
    %p26 = scmp.eq.s32.totalorder %s12, 0
    %p27 = por %p25, %p26
    %p28 = scmp.ne.s32.totalorder %s20, %s22
    %p29 = scmp.eq.s32.totalorder %s17, 1
    %p30 = por %p28, %p29
    %p31 = scmp.ne.s32.totalorder %s22, %s23
    %p32 = scmp.eq.s32.totalorder %s17, 0
    %p33 = por %p31, %p32
    %p34 = scmp.ne.s32.totalorder %s22, %s23
    %p35 = scmp.eq.s32.totalorder %s18, 1
    %p36 = por %p34, %p35
    %p38 = scmp.ne.s32.totalorder %s23, %s37
    %p39 = scmp.eq.s32.totalorder %s18, 0
    %p40 = por %p38, %p39
    %s41 = ssub.s32 %s12, %s19
    %p42 = scmp.eq.s32.totalorder %s41, 0
    %s44 = sadd.s32 %s43, 1
    %s45 = scalar_select %p42, %s43, %s44
    %p48 = pneg %p42
    %p49 = scmp.eq.s32.totalorder %s12, 1
    %p50 = por %p48, %p49
    %p51 = scmp.ne.s32.totalorder %s43, %s46
    %p52 = scmp.eq.s32.totalorder %s12, 0
    %p53 = por %p51, %p52
    %p54 = scmp.ne.s32.totalorder %s43, %s46
    %p55 = scmp.eq.s32.totalorder %s17, 1
    %p56 = por %p54, %p55
    %p57 = scmp.ne.s32.totalorder %s46, %s47
    %p58 = scmp.eq.s32.totalorder %s17, 0
    %p59 = por %p57, %p58
    %p60 = scmp.ne.s32.totalorder %s46, %s47
    %p61 = scmp.eq.s32.totalorder %s18, 1
    %p62 = por %p60, %p61
    %p64 = scmp.ne.s32.totalorder %s47, %s63
    %p65 = scmp.eq.s32.totalorder %s18, 0
    %p66 = por %p64, %p65
    %s68 = sadd.s32 %s67, 1
    %p71 = scmp.eq.s32.totalorder %s12, 1
    %p72 = scmp.ne.s32.totalorder %s67, %s69
    %p73 = scmp.eq.s32.totalorder %s12, 0
    %p74 = por %p72, %p73
    %p75 = scmp.ne.s32.totalorder %s67, %s69
    %p76 = scmp.eq.s32.totalorder %s17, 1
    %p77 = por %p75, %p76
    %p78 = scmp.ne.s32.totalorder %s69, %s70
    %p79 = scmp.eq.s32.totalorder %s17, 0
    %p80 = por %p78, %p79
    %p81 = scmp.ne.s32.totalorder %s69, %s70
    %p82 = scmp.eq.s32.totalorder %s18, 1
    %p83 = por %p81, %p82
    %p85 = scmp.ne.s32.totalorder %s70, %s84
    %p86 = scmp.eq.s32.totalorder %s18, 0
    %p87 = por %p85, %p86
    %s89 = sadd.s32 %s88, 1
    %p92 = scmp.eq.s32.totalorder %s12, 1
    %p93 = scmp.ne.s32.totalorder %s88, %s90
    %p94 = scmp.eq.s32.totalorder %s12, 0
    %p95 = por %p93, %p94
    %p96 = scmp.ne.s32.totalorder %s88, %s90
    %p97 = scmp.eq.s32.totalorder %s17, 1
    %p98 = por %p96, %p97
    %p99 = scmp.ne.s32.totalorder %s90, %s91
    %p100 = scmp.eq.s32.totalorder %s17, 0
    %p101 = por %p99, %p100
    %p102 = scmp.ne.s32.totalorder %s90, %s91
    %p103 = scmp.eq.s32.totalorder %s18, 1
    %p104 = por %p102, %p103
    %p106 = scmp.ne.s32.totalorder %s91, %s105
    %p107 = scmp.eq.s32.totalorder %s18, 0
    %p108 = por %p106, %p107
    %s110 = sadd.s32 %s109, 1
    %p113 = scmp.eq.s32.totalorder %s12, 1
    %p114 = scmp.ne.s32.totalorder %s109, %s111
    %p115 = scmp.eq.s32.totalorder %s12, 0
    %p116 = por %p114, %p115
    %p117 = scmp.ne.s32.totalorder %s109, %s111
    %p118 = scmp.eq.s32.totalorder %s17, 1
    %p119 = por %p117, %p118
    %p120 = scmp.ne.s32.totalorder %s111, %s112
    %p121 = scmp.eq.s32.totalorder %s17, 0
    %p122 = por %p120, %p121
    %p123 = scmp.ne.s32.totalorder %s111, %s112
    %p124 = scmp.eq.s32.totalorder %s18, 1
    %p125 = por %p123, %p124
    %p127 = scmp.ne.s32.totalorder %s112, %s126
    %p128 = scmp.eq.s32.totalorder %s18, 0
    %p129 = por %p127, %p128
    %s131 = sadd.s32 %s130, 1
    %p134 = scmp.eq.s32.totalorder %s12, 1
    %p135 = scmp.ne.s32.totalorder %s130, %s132
    %p136 = scmp.eq.s32.totalorder %s12, 0
    %p137 = por %p135, %p136
    %p138 = scmp.ne.s32.totalorder %s130, %s132
    %p139 = scmp.eq.s32.totalorder %s17, 1
    %p140 = por %p138, %p139
    %p141 = scmp.ne.s32.totalorder %s132, %s133
    %p142 = scmp.eq.s32.totalorder %s17, 0
    %p143 = por %p141, %p142
    %p144 = scmp.ne.s32.totalorder %s132, %s133
    %p145 = scmp.eq.s32.totalorder %s18, 1
    %p146 = por %p144, %p145
    %p148 = scmp.ne.s32.totalorder %s133, %s147
    %p149 = scmp.eq.s32.totalorder %s18, 0
    %p150 = por %p148, %p149
    %s151 = ssub.s32 %s12, %s19
    %p152 = scmp.eq.s32.totalorder %s151, 0
    %s154 = sadd.s32 %s153, 1
    %s155 = scalar_select %p152, %s153, %s154
    %p158 = pneg %p152
    %p159 = scmp.eq.s32.totalorder %s12, 1
    %p160 = por %p158, %p159
    %p161 = scmp.ne.s32.totalorder %s153, %s156
    %p162 = scmp.eq.s32.totalorder %s12, 0
    %p163 = por %p161, %p162
    %p164 = scmp.ne.s32.totalorder %s153, %s156
    %p165 = scmp.eq.s32.totalorder %s17, 1
    %p166 = por %p164, %p165
    %p167 = scmp.ne.s32.totalorder %s156, %s157
    %p168 = scmp.eq.s32.totalorder %s17, 0
    %p169 = por %p167, %p168
    %p170 = scmp.ne.s32.totalorder %s156, %s157
    %p171 = scmp.eq.s32.totalorder %s18, 1
    %p172 = por %p170, %p171
    %p174 = scmp.ne.s32.totalorder %s157, %s173
    %p175 = scmp.eq.s32.totalorder %s18, 0
    %p176 = por %p174, %p175
    %p177 = scmp.le.s32.totalorder 1, %s12
    %p178 = scmp.lt.s32.totalorder %s12, 3
    %p179 = pnand %p177, %p178
    %p180 = pneg %p179
    // Predicated region
    $region9: #{tpu_custom_call.1} parent=5 // pred_check
      _
    $region10: #{tpu_custom_call.1} parent=5 // pred_check_branch
      %182 = sbr.rel (%p179) target = $region12
    $region11: #{tpu_custom_call.1} parent=5 // pred_region
      %s183 = ssub.s32 %s12, 1
      // Predicated region
      $region13: #{tpu_custom_call.1} parent=11 // pred_check
        %p184 = pneg %p33
      $region14: #{tpu_custom_call.1} parent=11 // pred_check_branch
        %186 = sbr.rel (%p184) target = $region16
      $region15: #{tpu_custom_call.1} parent=11 // pred_region
        _
      $region16: #{tpu_custom_call.1} parent=11 // pred_fallthru
        _
      // Predicated region
      $region17: #{tpu_custom_call.1} parent=11 // pred_check
        %p187 = pneg %p80
      $region18: #{tpu_custom_call.1} parent=11 // pred_check_branch
        %189 = sbr.rel (%p187) target = $region20
      $region19: #{tpu_custom_call.1} parent=11 // pred_region
        _
      $region20: #{tpu_custom_call.1} parent=11 // pred_fallthru
        _
      // Predicated region
      $region21: #{tpu_custom_call.1} parent=11 // pred_check
        %p190 = pneg %p101
      $region22: #{tpu_custom_call.1} parent=11 // pred_check_branch
        %192 = sbr.rel (%p190) target = $region24
      $region23: #{tpu_custom_call.1} parent=11 // pred_region
        _
      $region24: #{tpu_custom_call.1} parent=11 // pred_fallthru
        _
      // Predicated region
      $region25: #{tpu_custom_call.1} parent=11 // pred_check
        %p193 = pneg %p122
      $region26: #{tpu_custom_call.1} parent=11 // pred_check_branch
        %195 = sbr.rel (%p193) target = $region28
      $region27: #{tpu_custom_call.1} parent=11 // pred_region
        _
      $region28: #{tpu_custom_call.1} parent=11 // pred_fallthru
        _
      // Predicated region
      $region29: #{tpu_custom_call.1} parent=11 // pred_check
        %p196 = pneg %p143
      $region30: #{tpu_custom_call.1} parent=11 // pred_check_branch
        %198 = sbr.rel (%p196) target = $region32
      $region31: #{tpu_custom_call.1} parent=11 // pred_region
        _
      $region32: #{tpu_custom_call.1} parent=11 // pred_fallthru
        _
    $region12: #{tpu_custom_call.1} parent=5 // pred_fallthru
      _
    %p199 = scmp.lt.s32.totalorder %s12, 2
    // Predicated region
    $region33: #{tpu_custom_call.1} parent=5 // pred_check
      %p200 = pneg %p199
    $region34: #{tpu_custom_call.1} parent=5 // pred_check_branch
      %202 = sbr.rel (%p200) target = $region36
    $region35: #{tpu_custom_call.1} parent=5 // pred_region
      // Predicated region
      $region37: #{tpu_custom_call.1} parent=35 // pred_check
        %p203 = pneg %p53
      $region38: #{tpu_custom_call.1} parent=35 // pred_check_branch
        %205 = sbr.rel (%p203) target = $region40
      $region39: #{tpu_custom_call.1} parent=35 // pred_region
        %s206 = smul.u32 16, %s12
        %p207 = scmp.lt.s32.totalorder %s206, 31
        %s208 = scalar_select %p207, %s206, 31
        %s209 = smul.addr %s208, 2
        %s210 = smul.addr %s209, 8
        %s211 = scalar_lea.vmem %s1, %s210
        %s212 = smul.u32 16, %s12
      $region40: #{tpu_custom_call.1} parent=35 // pred_fallthru
        _
    $region36: #{tpu_custom_call.1} parent=5 // pred_fallthru
      _
    %p213 = scmp.le.s32.totalorder 1, %s12
    %p214 = scmp.lt.s32.totalorder %s12, 3
    %p215 = pnand %p213, %p214
    %p216 = pneg %p215
    // Predicated region
    $region41: #{tpu_custom_call.1} parent=5 // pred_check
      _
    $region42: #{tpu_custom_call.1} parent=5 // pred_check_branch
      %218 = sbr.rel (%p215) target = $region44
    $region43: #{tpu_custom_call.1} parent=5 // pred_region
      %s219 = ssub.s32 %s12, 1
      %p220 = pneg %p33
      %p221 = pneg %p30
      %s222 = smul.u32 16, %s17
      %p223 = scmp.lt.s32.totalorder %s222, 31
      %s224 = scalar_select %p223, %s222, 31
      %s225 = smul.addr %s224, 2
      %s226 = smul.addr %s225, 8
      %s227 = scalar_lea.vmem %s1, %s226
      %p228 = pneg %p59
      %p229 = pneg %p56
      %p230 = pneg %p80
      %p231 = pneg %p77
      %p232 = pneg %p101
      %p233 = pneg %p98
      %p234 = pneg %p122
      %p235 = pneg %p119
      %p236 = pneg %p143
      %p237 = pneg %p140
      %p238 = pneg %p169
      %p239 = pneg %p166
      %s240 = smul.u32 16, %s17
      %p241 = scmp.lt.s32.totalorder %s240, 31
      %s242 = scalar_select %p241, %s240, 31
      %s243 = smul.addr %s242, 2
      %s244 = smul.addr %s243, 8
      %s245 = scalar_lea.vmem %s6, %s244
      %s246 = smul.u32 16, %s17
      %p247 = scmp.lt.s32.totalorder %s246, 31
      %s248 = scalar_select %p247, %s246, 31
      %s249 = smul.addr %s248, 2
      %s250 = smul.addr %s249, 8
      %s251 = scalar_lea.vmem %s1, %s250
      %s252 = smul.u32 16, %s17
      %s253 = smul.u32 16, %s17
      %p254 = scmp.lt.s32.totalorder %s253, 31
      %s255 = scalar_select %p254, %s253, 31
      %s256 = smul.addr %s255, 2
      %s257 = smul.addr %s256, 8
      %s258 = scalar_lea.vmem %s6, %s257
      %s259 = smul.u32 16, %s17
      %v261 = vld [vmem:[%s251] sm:$0xff]
      %v262 = vld [vmem:[%s251 + $0x8] sm:$0xff]
      %v263 = vld [vmem:[%s251 + $0x10] sm:$0xff]
      %v264 = vld [vmem:[%s251 + $0x18] sm:$0xff]
      %v265 = vld [vmem:[%s251 + $0x20] sm:$0xff]
      %v266 = vld [vmem:[%s251 + $0x28] sm:$0xff]
      %v267 = vld [vmem:[%s251 + $0x30] sm:$0xff]
      %v268 = vld [vmem:[%s251 + $0x38] sm:$0xff]
      %v269 = vld [vmem:[%s251 + $0x40] sm:$0xff]
      %v270 = vld [vmem:[%s251 + $0x48] sm:$0xff]
      %v271 = vld [vmem:[%s251 + $0x50] sm:$0xff]
      %v272 = vld [vmem:[%s251 + $0x58] sm:$0xff]
      %v273 = vld [vmem:[%s251 + $0x60] sm:$0xff]
      %v274 = vld [vmem:[%s251 + $0x68] sm:$0xff]
      %v275 = vld [vmem:[%s251 + $0x70] sm:$0xff]
      %v276 = vld [vmem:[%s251 + $0x78] sm:$0xff]
      %v277 = vld [vmem:[%s251 + $0x80] sm:$0xff]
      %v278 = vld [vmem:[%s251 + $0x88] sm:$0xff]
      %v279 = vld [vmem:[%s251 + $0x90] sm:$0xff]
      %v280 = vld [vmem:[%s251 + $0x98] sm:$0xff]
      %v281 = vld [vmem:[%s251 + $0xa0] sm:$0xff]
      %v282 = vld [vmem:[%s251 + $0xa8] sm:$0xff]
      %v283 = vld [vmem:[%s251 + $0xb0] sm:$0xff]
      %v284 = vld [vmem:[%s251 + $0xb8] sm:$0xff]
      %v285 = vld [vmem:[%s251 + $0xc0] sm:$0xff]
      %v286 = vld [vmem:[%s251 + $0xc8] sm:$0xff]
      %v287 = vld [vmem:[%s251 + $0xd0] sm:$0xff]
      %v288 = vld [vmem:[%s251 + $0xd8] sm:$0xff]
      %v289 = vld [vmem:[%s251 + $0xe0] sm:$0xff]
      %v290 = vld [vmem:[%s251 + $0xe8] sm:$0xff]
      %v291 = vld [vmem:[%s251 + $0xf0] sm:$0xff]
      %v292 = vld [vmem:[%s251 + $0xf8] sm:$0xff]
      %v293 = vld [vmem:[%s0] sm:$0xff]
      %v294 = vld [vmem:[%s0 + $0x8] sm:$0xff]
      %v295 = vpack.c.bf16 %v262, %v261
      %v296 = vpack.c.bf16 %v264, %v263
      %v297 = vpack.c.bf16 %v266, %v265
      %v298 = vpack.c.bf16 %v268, %v267
      %v299 = vpack.c.bf16 %v270, %v269
      %v300 = vpack.c.bf16 %v272, %v271
      %v301 = vpack.c.bf16 %v274, %v273
      %v302 = vpack.c.bf16 %v276, %v275
      %v303 = vpack.c.bf16 %v278, %v277
      %v304 = vpack.c.bf16 %v280, %v279
      %v305 = vpack.c.bf16 %v282, %v281
      %v306 = vpack.c.bf16 %v284, %v283
      %v307 = vpack.c.bf16 %v286, %v285
      %v308 = vpack.c.bf16 %v288, %v287
      %v309 = vpack.c.bf16 %v290, %v289
      %v310 = vpack.c.bf16 %v292, %v291
      %v311 = vld [vmem:[%s2] sm:$0xf]
      %v312 = vld [vmem:[%s2 + $0x4] sm:$0xf]
      %v313 = vld [vmem:[%s3] sm:$0x1]
      %v315 = vlaneseq
      %v316 = vshrl.u32 %v315, 7
      %v317 = vsub.s32 0, %v316
      %v318 = vrot.slane %v313, %v317
      %v322 = vunpack.c.l.b16 %v311
      %v323 = vunpack.c.l.b16 %v312
      %v324 = vpack.c.b16 %v323, %v322
      %vm326 = vcmask 130048
      %v328 = vsel %vm326, %v295, 0
      %v331 = vsel %vm326, %v296, 0
      %v334 = vsel %vm326, %v297, 0
      %v337 = vsel %vm326, %v298, 0
      %v340 = vsel %vm326, %v299, 0
      %v343 = vsel %vm326, %v300, 0
      %v346 = vsel %vm326, %v301, 0
      %v349 = vsel %vm326, %v302, 0
      %v352 = vsel %vm326, %v303, 0
      %v355 = vsel %vm326, %v304, 0
      %v358 = vsel %vm326, %v305, 0
      %v361 = vsel %vm326, %v306, 0
      %v364 = vsel %vm326, %v307, 0
      %v367 = vsel %vm326, %v308, 0
      %v370 = vsel %vm326, %v309, 0
      %v373 = vsel %vm326, %v310, 0
      %375 = vmatprep.subr.bf16.mxu0 0
      %376 = vmatpush1.bf16.msra.mxu0 %v324
      %377 = vmatprep.subr.bf16.mxu0 0
      %378 = vmatpush1.bf16.msra.mxu0 0
      %379 = vmatprep.subr.bf16.mxu0 0
      %380 = vmatpush1.bf16.msra.mxu0 0
      %381 = vmatprep.subr.bf16.mxu0 0
      %382 = vmatpush1.bf16.msra.mxu0 0
      %383 = vmatprep.subr.bf16.mxu0 0
      %384 = vmatpush1.bf16.msra.mxu0 0
      %385 = vmatprep.subr.bf16.mxu0 0
      %386 = vmatpush1.bf16.msra.mxu0 0
      %387 = vmatprep.subr.bf16.mxu0 0
      %388 = vmatpush1.bf16.msra.mxu0 0
      %389 = vmatprep.subr.bf16.mxu0 0
      %390 = vmatpush1.bf16.msra.mxu0 0
      %391 = vmatprep.subr.bf16.mxu0 0
      %392 = vmatpush1.bf16.msra.mxu0 0
      %393 = vmatprep.subr.bf16.mxu0 0
      %394 = vmatpush1.bf16.msra.mxu0 0
      %395 = vmatprep.subr.bf16.mxu0 0
      %396 = vmatpush1.bf16.msra.mxu0 0
      %397 = vmatprep.subr.bf16.mxu0 0
      %398 = vmatpush1.bf16.msra.mxu0 0
      %399 = vmatprep.subr.bf16.mxu0 0
      %400 = vmatpush1.bf16.msra.mxu0 0
      %401 = vmatprep.subr.bf16.mxu0 0
      %402 = vmatpush1.bf16.msra.mxu0 0
      %403 = vmatprep.subr.bf16.mxu0 0
      %404 = vmatpush1.bf16.msra.mxu0 0
      %405 = vmatprep.subr.bf16.mxu0 0
      %406 = vmatpush1.bf16.msra.mxu0 0
      %407 = vmatprep.mubr.bf16.mxu0 0
      %408 = vmatmul.mubr.bf16.gmra.mrb[0].mxu0 %v328
      %v409 = vpop.f32.mrb[0].mxu0
      %v410 = vadd.f32 %v318, %v409
      %v411 = vpop.f32.mrb[0].mxu0
      %v412 = vpop.f32.mrb[0].mxu0
      %v413 = vadd.f32 %v318, %v412
      %v414 = vpop.f32.mrb[0].mxu0
      %415 = vmatprep.mubr.bf16.mxu0 0
      %416 = vmatmul.mubr.bf16.gmra.mrb[0].mxu0 %v331
      %v417 = vpop.f32.mrb[0].mxu0
      %v418 = vadd.f32 %v318, %v417
      %v419 = vpop.f32.mrb[0].mxu0
      %v420 = vpop.f32.mrb[0].mxu0
      %v421 = vadd.f32 %v318, %v420
      %v422 = vpop.f32.mrb[0].mxu0
      %423 = vmatprep.mubr.bf16.mxu0 0
      %424 = vmatmul.mubr.bf16.gmra.mrb[0].mxu0 %v334
      %v425 = vpop.f32.mrb[0].mxu0
      %v426 = vadd.f32 %v318, %v425
      %v427 = vpop.f32.mrb[0].mxu0
      %v428 = vpop.f32.mrb[0].mxu0
      %v429 = vadd.f32 %v318, %v428
      %v430 = vpop.f32.mrb[0].mxu0
      %431 = vmatprep.mubr.bf16.mxu0 0
      %432 = vmatmul.mubr.bf16.gmra.mrb[0].mxu0 %v337
      %v433 = vpop.f32.mrb[0].mxu0
      %v434 = vadd.f32 %v318, %v433
      %v435 = vpop.f32.mrb[0].mxu0
      %v436 = vpop.f32.mrb[0].mxu0
      %v437 = vadd.f32 %v318, %v436
      %v438 = vpop.f32.mrb[0].mxu0
      %439 = vmatprep.mubr.bf16.mxu0 0
      %440 = vmatmul.mubr.bf16.gmra.mrb[0].mxu0 %v340
      %v441 = vpop.f32.mrb[0].mxu0
      %v442 = vadd.f32 %v318, %v441
      %v443 = vpop.f32.mrb[0].mxu0
      %v444 = vpop.f32.mrb[0].mxu0
      %v445 = vadd.f32 %v318, %v444
      %v446 = vpop.f32.mrb[0].mxu0
      %447 = vmatprep.mubr.bf16.mxu0 0
      %448 = vmatmul.mubr.bf16.gmra.mrb[0].mxu0 %v343
      %v449 = vpop.f32.mrb[0].mxu0
      %v450 = vadd.f32 %v318, %v449
      %v451 = vpop.f32.mrb[0].mxu0
      %v452 = vpop.f32.mrb[0].mxu0
      %v453 = vadd.f32 %v318, %v452
      %v454 = vpop.f32.mrb[0].mxu0
      %455 = vmatprep.mubr.bf16.mxu0 0
      %456 = vmatmul.mubr.bf16.gmra.mrb[0].mxu0 %v346
      %v457 = vpop.f32.mrb[0].mxu0
      %v458 = vadd.f32 %v318, %v457
      %v459 = vpop.f32.mrb[0].mxu0
      %v460 = vpop.f32.mrb[0].mxu0
      %v461 = vadd.f32 %v318, %v460
      %v462 = vpop.f32.mrb[0].mxu0
      %463 = vmatprep.mubr.bf16.mxu0 0
      %464 = vmatmul.mubr.bf16.gmra.mrb[0].mxu0 %v349
      %v465 = vpop.f32.mrb[0].mxu0
      %v466 = vadd.f32 %v318, %v465
      %v467 = vpop.f32.mrb[0].mxu0
      %v468 = vpop.f32.mrb[0].mxu0
      %v469 = vadd.f32 %v318, %v468
      %v470 = vpop.f32.mrb[0].mxu0
      %471 = vmatprep.mubr.bf16.mxu0 0
      %472 = vmatmul.mubr.bf16.gmra.mrb[0].mxu0 %v352
      %v473 = vpop.f32.mrb[0].mxu0
      %v474 = vadd.f32 %v318, %v473
      %v475 = vpop.f32.mrb[0].mxu0
      %v476 = vpop.f32.mrb[0].mxu0
      %v477 = vadd.f32 %v318, %v476
      %v478 = vpop.f32.mrb[0].mxu0
      %479 = vmatprep.mubr.bf16.mxu0 0
      %480 = vmatmul.mubr.bf16.gmra.mrb[0].mxu0 %v355
      %v481 = vpop.f32.mrb[0].mxu0
      %v482 = vadd.f32 %v318, %v481
      %v483 = vpop.f32.mrb[0].mxu0
      %v484 = vpop.f32.mrb[0].mxu0
      %v485 = vadd.f32 %v318, %v484
      %v486 = vpop.f32.mrb[0].mxu0
      %487 = vmatprep.mubr.bf16.mxu0 0
      %488 = vmatmul.mubr.bf16.gmra.mrb[0].mxu0 %v358
      %v489 = vpop.f32.mrb[0].mxu0
      %v490 = vadd.f32 %v318, %v489
      %v491 = vpop.f32.mrb[0].mxu0
      %v492 = vpop.f32.mrb[0].mxu0
      %v493 = vadd.f32 %v318, %v492
      %v494 = vpop.f32.mrb[0].mxu0
      %495 = vmatprep.mubr.bf16.mxu0 0
      %496 = vmatmul.mubr.bf16.gmra.mrb[0].mxu0 %v361
      %v497 = vpop.f32.mrb[0].mxu0
      %v498 = vadd.f32 %v318, %v497
      %v499 = vpop.f32.mrb[0].mxu0
      %v500 = vpop.f32.mrb[0].mxu0
      %v501 = vadd.f32 %v318, %v500
      %v502 = vpop.f32.mrb[0].mxu0
      %503 = vmatprep.mubr.bf16.mxu0 0
      %504 = vmatmul.mubr.bf16.gmra.mrb[0].mxu0 %v364
      %v505 = vpop.f32.mrb[0].mxu0
      %v506 = vadd.f32 %v318, %v505
      %v507 = vpop.f32.mrb[0].mxu0
      %v508 = vpop.f32.mrb[0].mxu0
      %v509 = vadd.f32 %v318, %v508
      %v510 = vpop.f32.mrb[0].mxu0
      %511 = vmatprep.mubr.bf16.mxu0 0
      %512 = vmatmul.mubr.bf16.gmra.mrb[0].mxu0 %v367
      %v513 = vpop.f32.mrb[0].mxu0
      %v514 = vadd.f32 %v318, %v513
      %v515 = vpop.f32.mrb[0].mxu0
      %v516 = vpop.f32.mrb[0].mxu0
      %v517 = vadd.f32 %v318, %v516
      %v518 = vpop.f32.mrb[0].mxu0
      %519 = vmatprep.mubr.bf16.mxu0 0
      %520 = vmatmul.mubr.bf16.gmra.mrb[0].mxu0 %v370
      %v521 = vpop.f32.mrb[0].mxu0
      %v522 = vadd.f32 %v318, %v521
      %v523 = vpop.f32.mrb[0].mxu0
      %v524 = vpop.f32.mrb[0].mxu0
      %v525 = vadd.f32 %v318, %v524
      %v526 = vpop.f32.mrb[0].mxu0
      %527 = vmatprep.mubr.bf16.mxu0 0
      %528 = vmatmul.mubr.bf16.gmra.mrb[0].mxu0 %v373
      %v529 = vpop.f32.mrb[0].mxu0
      %v530 = vadd.f32 %v318, %v529
      %v531 = vpop.f32.mrb[0].mxu0
      %v532 = vpop.f32.mrb[0].mxu0
      %v533 = vadd.f32 %v318, %v532
      %v534 = vpop.f32.mrb[0].mxu0
      %535 = vdwg.mxu0
      %v536 = vmax.f32 %v410, 0.0
      %v537 = vmax.f32 %v413, 0.0
      %v538 = vmax.f32 %v418, 0.0
      %v539 = vmax.f32 %v421, 0.0
      %v540 = vmax.f32 %v426, 0.0
      %v541 = vmax.f32 %v429, 0.0
      %v542 = vmax.f32 %v434, 0.0
      %v543 = vmax.f32 %v437, 0.0
      %v544 = vmax.f32 %v442, 0.0
      %v545 = vmax.f32 %v445, 0.0
      %v546 = vmax.f32 %v450, 0.0
      %v547 = vmax.f32 %v453, 0.0
      %v548 = vmax.f32 %v458, 0.0
      %v549 = vmax.f32 %v461, 0.0
      %v550 = vmax.f32 %v466, 0.0
      %v551 = vmax.f32 %v469, 0.0
      %v552 = vmax.f32 %v474, 0.0
      %v553 = vmax.f32 %v477, 0.0
      %v554 = vmax.f32 %v482, 0.0
      %v555 = vmax.f32 %v485, 0.0
      %v556 = vmax.f32 %v490, 0.0
      %v557 = vmax.f32 %v493, 0.0
      %v558 = vmax.f32 %v498, 0.0
      %v559 = vmax.f32 %v501, 0.0
      %v560 = vmax.f32 %v506, 0.0
      %v561 = vmax.f32 %v509, 0.0
      %v562 = vmax.f32 %v514, 0.0
      %v563 = vmax.f32 %v517, 0.0
      %v564 = vmax.f32 %v522, 0.0
      %v565 = vmax.f32 %v525, 0.0
      %v566 = vmax.f32 %v530, 0.0
      %v567 = vmax.f32 %v533, 0.0
      %v568 = vld [vmem:[%s4] sm:$0xff]
      %v569 = vld [vmem:[%s4 + $0x8] sm:$0xff]
      %v570 = vmul.f32 %v261, %v568
      %v571 = vmul.f32 %v262, %v569
      %v572 = vmul.f32 %v263, %v568
      %v573 = vmul.f32 %v264, %v569
      %v574 = vmul.f32 %v265, %v568
      %v575 = vmul.f32 %v266, %v569
      %v576 = vmul.f32 %v267, %v568
      %v577 = vmul.f32 %v268, %v569
      %v578 = vmul.f32 %v269, %v568
      %v579 = vmul.f32 %v270, %v569
      %v580 = vmul.f32 %v271, %v568
      %v581 = vmul.f32 %v272, %v569
      %v582 = vmul.f32 %v273, %v568
      %v583 = vmul.f32 %v274, %v569
      %v584 = vmul.f32 %v275, %v568
      %v585 = vmul.f32 %v276, %v569
      %v586 = vmul.f32 %v277, %v568
      %v587 = vmul.f32 %v278, %v569
      %v588 = vmul.f32 %v279, %v568
      %v589 = vmul.f32 %v280, %v569
      %v590 = vmul.f32 %v281, %v568
      %v591 = vmul.f32 %v282, %v569
      %v592 = vmul.f32 %v283, %v568
      %v593 = vmul.f32 %v284, %v569
      %v594 = vmul.f32 %v285, %v568
      %v595 = vmul.f32 %v286, %v569
      %v596 = vmul.f32 %v287, %v568
      %v597 = vmul.f32 %v288, %v569
      %v598 = vmul.f32 %v289, %v568
      %v599 = vmul.f32 %v290, %v569
      %v600 = vmul.f32 %v291, %v568
      %v601 = vmul.f32 %v292, %v569
      %v602 = vsel %vm326, %v570, 0.0
      %603 = vadd.xlane.f32.xlu0 %v602
      %v604 = vpop.xlane.xlu0 %603
      %v605 = vsel %vm326, %v571, 0.0
      %606 = vadd.xlane.f32.xlu0 %v605
      %v607 = vpop.xlane.xlu0 %606
      %v608 = vsel %vm326, %v572, 0.0
      %609 = vadd.xlane.f32.xlu0 %v608
      %v610 = vpop.xlane.xlu0 %609
      %v611 = vsel %vm326, %v573, 0.0
      %612 = vadd.xlane.f32.xlu0 %v611
      %v613 = vpop.xlane.xlu0 %612
      %v614 = vsel %vm326, %v574, 0.0
      %615 = vadd.xlane.f32.xlu0 %v614
      %v616 = vpop.xlane.xlu0 %615
      %v617 = vsel %vm326, %v575, 0.0
      %618 = vadd.xlane.f32.xlu0 %v617
      %v619 = vpop.xlane.xlu0 %618
      %v620 = vsel %vm326, %v576, 0.0
      %621 = vadd.xlane.f32.xlu0 %v620
      %v622 = vpop.xlane.xlu0 %621
      %v623 = vsel %vm326, %v577, 0.0
      %624 = vadd.xlane.f32.xlu0 %v623
      %v625 = vpop.xlane.xlu0 %624
      %v626 = vsel %vm326, %v578, 0.0
      %627 = vadd.xlane.f32.xlu0 %v626
      %v628 = vpop.xlane.xlu0 %627
      %v629 = vsel %vm326, %v579, 0.0
      %630 = vadd.xlane.f32.xlu0 %v629
      %v631 = vpop.xlane.xlu0 %630
      %v632 = vsel %vm326, %v580, 0.0
      %633 = vadd.xlane.f32.xlu0 %v632
      %v634 = vpop.xlane.xlu0 %633
      %v635 = vsel %vm326, %v581, 0.0
      %636 = vadd.xlane.f32.xlu0 %v635
      %v637 = vpop.xlane.xlu0 %636
      %v638 = vsel %vm326, %v582, 0.0
      %639 = vadd.xlane.f32.xlu0 %v638
      %v640 = vpop.xlane.xlu0 %639
      %v641 = vsel %vm326, %v583, 0.0
      %642 = vadd.xlane.f32.xlu0 %v641
      %v643 = vpop.xlane.xlu0 %642
      %v644 = vsel %vm326, %v584, 0.0
      %645 = vadd.xlane.f32.xlu0 %v644
      %v646 = vpop.xlane.xlu0 %645
      %v647 = vsel %vm326, %v585, 0.0
      %648 = vadd.xlane.f32.xlu0 %v647
      %v649 = vpop.xlane.xlu0 %648
      %v650 = vsel %vm326, %v586, 0.0
      %651 = vadd.xlane.f32.xlu0 %v650
      %v652 = vpop.xlane.xlu0 %651
      %v653 = vsel %vm326, %v587, 0.0
      %654 = vadd.xlane.f32.xlu0 %v653
      %v655 = vpop.xlane.xlu0 %654
      %v656 = vsel %vm326, %v588, 0.0
      %657 = vadd.xlane.f32.xlu0 %v656
      %v658 = vpop.xlane.xlu0 %657
      %v659 = vsel %vm326, %v589, 0.0
      %660 = vadd.xlane.f32.xlu0 %v659
      %v661 = vpop.xlane.xlu0 %660
      %v662 = vsel %vm326, %v590, 0.0
      %663 = vadd.xlane.f32.xlu0 %v662
      %v664 = vpop.xlane.xlu0 %663
      %v665 = vsel %vm326, %v591, 0.0
      %666 = vadd.xlane.f32.xlu0 %v665
      %v667 = vpop.xlane.xlu0 %666
      %v668 = vsel %vm326, %v592, 0.0
      %669 = vadd.xlane.f32.xlu0 %v668
      %v670 = vpop.xlane.xlu0 %669
      %v671 = vsel %vm326, %v593, 0.0
      %672 = vadd.xlane.f32.xlu0 %v671
      %v673 = vpop.xlane.xlu0 %672
      %v674 = vsel %vm326, %v594, 0.0
      %675 = vadd.xlane.f32.xlu0 %v674
      %v676 = vpop.xlane.xlu0 %675
      %v677 = vsel %vm326, %v595, 0.0
      %678 = vadd.xlane.f32.xlu0 %v677
      %v679 = vpop.xlane.xlu0 %678
      %v680 = vsel %vm326, %v596, 0.0
      %681 = vadd.xlane.f32.xlu0 %v680
      %v682 = vpop.xlane.xlu0 %681
      %v683 = vsel %vm326, %v597, 0.0
      %684 = vadd.xlane.f32.xlu0 %v683
      %v685 = vpop.xlane.xlu0 %684
      %v686 = vsel %vm326, %v598, 0.0
      %687 = vadd.xlane.f32.xlu0 %v686
      %v688 = vpop.xlane.xlu0 %687
      %v689 = vsel %vm326, %v599, 0.0
      %690 = vadd.xlane.f32.xlu0 %v689
      %v691 = vpop.xlane.xlu0 %690
      %v692 = vsel %vm326, %v600, 0.0
      %693 = vadd.xlane.f32.xlu0 %v692
      %v694 = vpop.xlane.xlu0 %693
      %v695 = vsel %vm326, %v601, 0.0
      %696 = vadd.xlane.f32.xlu0 %v695
      %v697 = vpop.xlane.xlu0 %696
      %v698 = vld [vmem:[%s5] sm:$0x1]
      %v700 = vlaneseq
      %v701 = vshrl.u32 %v700, 7
      %v702 = vsub.s32 0, %v701
      %v703 = vrot.slane %v698, %v702
      %705 = vbcast.lane.b32.xlu0 %v703, 256
      %v706 = vpop.permute.xlu0 %705
      %s708 = sor.u32 256, 8
      %709 = vbcast.lane.b32.xlu0 %v703, %s708
      %v710 = vpop.permute.xlu0 %709
      %v713 = vadd.f32 %v604, %v706
      %v714 = vadd.f32 %v607, %v710
      %v715 = vadd.f32 %v610, %v706
      %v716 = vadd.f32 %v613, %v710
      %v717 = vadd.f32 %v616, %v706
      %v718 = vadd.f32 %v619, %v710
      %v719 = vadd.f32 %v622, %v706
      %v720 = vadd.f32 %v625, %v710
      %v721 = vadd.f32 %v628, %v706
      %v722 = vadd.f32 %v631, %v710
      %v723 = vadd.f32 %v634, %v706
      %v724 = vadd.f32 %v637, %v710
      %v725 = vadd.f32 %v640, %v706
      %v726 = vadd.f32 %v643, %v710
      %v727 = vadd.f32 %v646, %v706
      %v728 = vadd.f32 %v649, %v710
      %v729 = vadd.f32 %v652, %v706
      %v730 = vadd.f32 %v655, %v710
      %v731 = vadd.f32 %v658, %v706
      %v732 = vadd.f32 %v661, %v710
      %v733 = vadd.f32 %v664, %v706
      %v734 = vadd.f32 %v667, %v710
      %v735 = vadd.f32 %v670, %v706
      %v736 = vadd.f32 %v673, %v710
      %v737 = vadd.f32 %v676, %v706
      %v738 = vadd.f32 %v679, %v710
      %v739 = vadd.f32 %v682, %v706
      %v740 = vadd.f32 %v685, %v710
      %v741 = vadd.f32 %v688, %v706
      %v742 = vadd.f32 %v691, %v710
      %v743 = vadd.f32 %v694, %v706
      %v744 = vadd.f32 %v697, %v710
      %v745 = vpack.c.bf16 %v537, %v536
      %v746 = vpack.c.bf16 %v539, %v538
      %v747 = vpack.c.bf16 %v541, %v540
      %v748 = vpack.c.bf16 %v543, %v542
      %v749 = vpack.c.bf16 %v545, %v544
      %v750 = vpack.c.bf16 %v547, %v546
      %v751 = vpack.c.bf16 %v549, %v548
      %v752 = vpack.c.bf16 %v551, %v550
      %v753 = vpack.c.bf16 %v553, %v552
      %v754 = vpack.c.bf16 %v555, %v554
      %v755 = vpack.c.bf16 %v557, %v556
      %v756 = vpack.c.bf16 %v559, %v558
      %v757 = vpack.c.bf16 %v561, %v560
      %v758 = vpack.c.bf16 %v563, %v562
      %v759 = vpack.c.bf16 %v565, %v564
      %v760 = vpack.c.bf16 %v567, %v566
      %762 = vrot.lane.b32.xlu0 %v745, 112
      %v763 = vpop.permute.xlu0 %762
      %v765 = vsel %vm326, %v745, 0
      %v768 = vsel %vm326, %v763, 0
      %770 = vmatprep.subr.bf16.mxu0 0
      %771 = vmatpush1.bf16.xpose.msra.mxu0 %v768
      %772 = vmatprep.subr.bf16.mxu0 0
      %773 = vmatpush1.bf16.xpose.msra.mxu0 0
      %774 = vmatprep.subr.bf16.mxu0 0
      %775 = vmatpush1.bf16.xpose.msra.mxu0 0
      %776 = vmatprep.subr.bf16.mxu0 0
      %777 = vmatpush1.bf16.xpose.msra.mxu0 0
      %778 = vmatprep.subr.bf16.mxu0 0
      %779 = vmatpush1.bf16.xpose.msra.mxu0 0
      %780 = vmatprep.subr.bf16.mxu0 0
      %781 = vmatpush1.bf16.xpose.msra.mxu0 0
      %782 = vmatprep.subr.bf16.mxu0 0
      %783 = vmatpush1.bf16.xpose.msra.mxu0 0
      %784 = vmatprep.subr.bf16.mxu0 0
      %785 = vmatpush1.bf16.xpose.msra.mxu0 0
      %786 = vmatprep.subr.bf16.mxu0 0
      %787 = vmatpush1.bf16.xpose.msra.mxu0 0
      %788 = vmatprep.subr.bf16.mxu0 0
      %789 = vmatpush1.bf16.xpose.msra.mxu0 0
      %790 = vmatprep.subr.bf16.mxu0 0
      %791 = vmatpush1.bf16.xpose.msra.mxu0 0
      %792 = vmatprep.subr.bf16.mxu0 0
      %793 = vmatpush1.bf16.xpose.msra.mxu0 0
      %794 = vmatprep.subr.bf16.mxu0 0
      %795 = vmatpush1.bf16.xpose.msra.mxu0 0
      %796 = vmatprep.subr.bf16.mxu0 0
      %797 = vmatpush1.bf16.xpose.msra.mxu0 0
      %798 = vmatprep.subr.bf16.mxu0 0
      %799 = vmatpush1.bf16.xpose.msra.mxu0 0
      %800 = vmatprep.subr.bf16.mxu0 0
      %801 = vmatpush1.bf16.xpose.msra.mxu0 0
      %802 = vmatprep.mubr.bf16.mxu0 0
      %803 = vmatmul.mubr.bf16.gmra.mrb[0].mxu0 %v765
      %v804 = vpop.f32.mrb[0].mxu0
      %v805 = vadd.f32 0.0, %v804
      %v806 = vpop.f32.mrb[0].mxu0
      %v807 = vpop.f32.mrb[0].mxu0
      %v808 = vadd.f32 0.0, %v807
      %v809 = vpop.f32.mrb[0].mxu0
      %810 = vdwg.mxu0
      %812 = vrot.lane.b32.xlu0 %v746, 112
      %v813 = vpop.permute.xlu0 %812
      %v815 = vsel %vm326, %v746, 0
      %v818 = vsel %vm326, %v813, 0
      %820 = vmatprep.subr.bf16.mxu0 0
      %821 = vmatpush1.bf16.xpose.msra.mxu0 %v818
      %822 = vmatprep.subr.bf16.mxu0 0
      %823 = vmatpush1.bf16.xpose.msra.mxu0 0
      %824 = vmatprep.subr.bf16.mxu0 0
      %825 = vmatpush1.bf16.xpose.msra.mxu0 0
      %826 = vmatprep.subr.bf16.mxu0 0
      %827 = vmatpush1.bf16.xpose.msra.mxu0 0
      %828 = vmatprep.subr.bf16.mxu0 0
      %829 = vmatpush1.bf16.xpose.msra.mxu0 0
      %830 = vmatprep.subr.bf16.mxu0 0
      %831 = vmatpush1.bf16.xpose.msra.mxu0 0
      %832 = vmatprep.subr.bf16.mxu0 0
      %833 = vmatpush1.bf16.xpose.msra.mxu0 0
      %834 = vmatprep.subr.bf16.mxu0 0
      %835 = vmatpush1.bf16.xpose.msra.mxu0 0
      %836 = vmatprep.subr.bf16.mxu0 0
      %837 = vmatpush1.bf16.xpose.msra.mxu0 0
      %838 = vmatprep.subr.bf16.mxu0 0
      %839 = vmatpush1.bf16.xpose.msra.mxu0 0
      %840 = vmatprep.subr.bf16.mxu0 0
      %841 = vmatpush1.bf16.xpose.msra.mxu0 0
      %842 = vmatprep.subr.bf16.mxu0 0
      %843 = vmatpush1.bf16.xpose.msra.mxu0 0
      %844 = vmatprep.subr.bf16.mxu0 0
      %845 = vmatpush1.bf16.xpose.msra.mxu0 0
      %846 = vmatprep.subr.bf16.mxu0 0
      %847 = vmatpush1.bf16.xpose.msra.mxu0 0
      %848 = vmatprep.subr.bf16.mxu0 0
      %849 = vmatpush1.bf16.xpose.msra.mxu0 0
      %850 = vmatprep.subr.bf16.mxu0 0
      %851 = vmatpush1.bf16.xpose.msra.mxu0 0
      %852 = vmatprep.mubr.bf16.mxu0 0
      %853 = vmatmul.mubr.bf16.gmra.mrb[0].mxu0 %v815
      %v854 = vpop.f32.mrb[0].mxu0
      %v855 = vadd.f32 0.0, %v854
      %v856 = vpop.f32.mrb[0].mxu0
      %v857 = vpop.f32.mrb[0].mxu0
      %v858 = vadd.f32 0.0, %v857
      %v859 = vpop.f32.mrb[0].mxu0
      %860 = vdwg.mxu0
      %862 = vrot.lane.b32.xlu0 %v747, 112
      %v863 = vpop.permute.xlu0 %862
      %v865 = vsel %vm326, %v747, 0
      %v868 = vsel %vm326, %v863, 0
      %870 = vmatprep.subr.bf16.mxu0 0
      %871 = vmatpush1.bf16.xpose.msra.mxu0 %v868
      %872 = vmatprep.subr.bf16.mxu0 0
      %873 = vmatpush1.bf16.xpose.msra.mxu0 0
      %874 = vmatprep.subr.bf16.mxu0 0
      %875 = vmatpush1.bf16.xpose.msra.mxu0 0
      %876 = vmatprep.subr.bf16.mxu0 0
      %877 = vmatpush1.bf16.xpose.msra.mxu0 0
      %878 = vmatprep.subr.bf16.mxu0 0
      %879 = vmatpush1.bf16.xpose.msra.mxu0 0
      %880 = vmatprep.subr.bf16.mxu0 0
      %881 = vmatpush1.bf16.xpose.msra.mxu0 0
      %882 = vmatprep.subr.bf16.mxu0 0
      %883 = vmatpush1.bf16.xpose.msra.mxu0 0
      %884 = vmatprep.subr.bf16.mxu0 0
      %885 = vmatpush1.bf16.xpose.msra.mxu0 0
      %886 = vmatprep.subr.bf16.mxu0 0
      %887 = vmatpush1.bf16.xpose.msra.mxu0 0
      %888 = vmatprep.subr.bf16.mxu0 0
      %889 = vmatpush1.bf16.xpose.msra.mxu0 0
      %890 = vmatprep.subr.bf16.mxu0 0
      %891 = vmatpush1.bf16.xpose.msra.mxu0 0
      %892 = vmatprep.subr.bf16.mxu0 0
      %893 = vmatpush1.bf16.xpose.msra.mxu0 0
      %894 = vmatprep.subr.bf16.mxu0 0
      %895 = vmatpush1.bf16.xpose.msra.mxu0 0
      %896 = vmatprep.subr.bf16.mxu0 0
      %897 = vmatpush1.bf16.xpose.msra.mxu0 0
      %898 = vmatprep.subr.bf16.mxu0 0
      %899 = vmatpush1.bf16.xpose.msra.mxu0 0
      %900 = vmatprep.subr.bf16.mxu0 0
      %901 = vmatpush1.bf16.xpose.msra.mxu0 0
      %902 = vmatprep.mubr.bf16.mxu0 0
      %903 = vmatmul.mubr.bf16.gmra.mrb[0].mxu0 %v865
      %v904 = vpop.f32.mrb[0].mxu0
      %v905 = vadd.f32 0.0, %v904
      %v906 = vpop.f32.mrb[0].mxu0
      %v907 = vpop.f32.mrb[0].mxu0
      %v908 = vadd.f32 0.0, %v907
      %v909 = vpop.f32.mrb[0].mxu0
      %910 = vdwg.mxu0
      %912 = vrot.lane.b32.xlu0 %v748, 112
      %v913 = vpop.permute.xlu0 %912
      %v915 = vsel %vm326, %v748, 0
      %v918 = vsel %vm326, %v913, 0
      %920 = vmatprep.subr.bf16.mxu0 0
      %921 = vmatpush1.bf16.xpose.msra.mxu0 %v918
      %922 = vmatprep.subr.bf16.mxu0 0
      %923 = vmatpush1.bf16.xpose.msra.mxu0 0
      %924 = vmatprep.subr.bf16.mxu0 0
      %925 = vmatpush1.bf16.xpose.msra.mxu0 0
      %926 = vmatprep.subr.bf16.mxu0 0
      %927 = vmatpush1.bf16.xpose.msra.mxu0 0
      %928 = vmatprep.subr.bf16.mxu0 0
      %929 = vmatpush1.bf16.xpose.msra.mxu0 0
      %930 = vmatprep.subr.bf16.mxu0 0
      %931 = vmatpush1.bf16.xpose.msra.mxu0 0
      %932 = vmatprep.subr.bf16.mxu0 0
      %933 = vmatpush1.bf16.xpose.msra.mxu0 0
      %934 = vmatprep.subr.bf16.mxu0 0
      %935 = vmatpush1.bf16.xpose.msra.mxu0 0
      %936 = vmatprep.subr.bf16.mxu0 0
      %937 = vmatpush1.bf16.xpose.msra.mxu0 0
      %938 = vmatprep.subr.bf16.mxu0 0
      %939 = vmatpush1.bf16.xpose.msra.mxu0 0
      %940 = vmatprep.subr.bf16.mxu0 0
      %941 = vmatpush1.bf16.xpose.msra.mxu0 0
      %942 = vmatprep.subr.bf16.mxu0 0
      %943 = vmatpush1.bf16.xpose.msra.mxu0 0
      %944 = vmatprep.subr.bf16.mxu0 0
      %945 = vmatpush1.bf16.xpose.msra.mxu0 0
      %946 = vmatprep.subr.bf16.mxu0 0
      %947 = vmatpush1.bf16.xpose.msra.mxu0 0
      %948 = vmatprep.subr.bf16.mxu0 0
      %949 = vmatpush1.bf16.xpose.msra.mxu0 0
      %950 = vmatprep.subr.bf16.mxu0 0
      %951 = vmatpush1.bf16.xpose.msra.mxu0 0
      %952 = vmatprep.mubr.bf16.mxu0 0
      %953 = vmatmul.mubr.bf16.gmra.mrb[0].mxu0 %v915
      %v954 = vpop.f32.mrb[0].mxu0
      %v955 = vadd.f32 0.0, %v954
      %v956 = vpop.f32.mrb[0].mxu0
      %v957 = vpop.f32.mrb[0].mxu0
      %v958 = vadd.f32 0.0, %v957
      %v959 = vpop.f32.mrb[0].mxu0
      %960 = vdwg.mxu0
      %962 = vrot.lane.b32.xlu0 %v749, 112
      %v963 = vpop.permute.xlu0 %962
      %v965 = vsel %vm326, %v749, 0
      %v968 = vsel %vm326, %v963, 0
      %970 = vmatprep.subr.bf16.mxu0 0
      %971 = vmatpush1.bf16.xpose.msra.mxu0 %v968
      %972 = vmatprep.subr.bf16.mxu0 0
      %973 = vmatpush1.bf16.xpose.msra.mxu0 0
      %974 = vmatprep.subr.bf16.mxu0 0
      %975 = vmatpush1.bf16.xpose.msra.mxu0 0
      %976 = vmatprep.subr.bf16.mxu0 0
      %977 = vmatpush1.bf16.xpose.msra.mxu0 0
      %978 = vmatprep.subr.bf16.mxu0 0
      %979 = vmatpush1.bf16.xpose.msra.mxu0 0
      %980 = vmatprep.subr.bf16.mxu0 0
      %981 = vmatpush1.bf16.xpose.msra.mxu0 0
      %982 = vmatprep.subr.bf16.mxu0 0
      %983 = vmatpush1.bf16.xpose.msra.mxu0 0
      %984 = vmatprep.subr.bf16.mxu0 0
      %985 = vmatpush1.bf16.xpose.msra.mxu0 0
      %986 = vmatprep.subr.bf16.mxu0 0
      %987 = vmatpush1.bf16.xpose.msra.mxu0 0
      %988 = vmatprep.subr.bf16.mxu0 0
      %989 = vmatpush1.bf16.xpose.msra.mxu0 0
      %990 = vmatprep.subr.bf16.mxu0 0
      %991 = vmatpush1.bf16.xpose.msra.mxu0 0
      %992 = vmatprep.subr.bf16.mxu0 0
      %993 = vmatpush1.bf16.xpose.msra.mxu0 0
      %994 = vmatprep.subr.bf16.mxu0 0
      %995 = vmatpush1.bf16.xpose.msra.mxu0 0
      %996 = vmatprep.subr.bf16.mxu0 0
      %997 = vmatpush1.bf16.xpose.msra.mxu0 0
      %998 = vmatprep.subr.bf16.mxu0 0
      %999 = vmatpush1.bf16.xpose.msra.mxu0 0
      %1000 = vmatprep.subr.bf16.mxu0 0
      %1001 = vmatpush1.bf16.xpose.msra.mxu0 0
      %1002 = vmatprep.mubr.bf16.mxu0 0
      %1003 = vmatmul.mubr.bf16.gmra.mrb[0].mxu0 %v965
      %v1004 = vpop.f32.mrb[0].mxu0
      %v1005 = vadd.f32 0.0, %v1004
      %v1006 = vpop.f32.mrb[0].mxu0
      %v1007 = vpop.f32.mrb[0].mxu0
      %v1008 = vadd.f32 0.0, %v1007
      %v1009 = vpop.f32.mrb[0].mxu0
      %1010 = vdwg.mxu0
      %1012 = vrot.lane.b32.xlu0 %v750, 112
      %v1013 = vpop.permute.xlu0 %1012
      %v1015 = vsel %vm326, %v750, 0
      %v1018 = vsel %vm326, %v1013, 0
      %1020 = vmatprep.subr.bf16.mxu0 0
      %1021 = vmatpush1.bf16.xpose.msra.mxu0 %v1018
      %1022 = vmatprep.subr.bf16.mxu0 0
      %1023 = vmatpush1.bf16.xpose.msra.mxu0 0
      %1024 = vmatprep.subr.bf16.mxu0 0
      %1025 = vmatpush1.bf16.xpose.msra.mxu0 0
      %1026 = vmatprep.subr.bf16.mxu0 0
      %1027 = vmatpush1.bf16.xpose.msra.mxu0 0
      %1028 = vmatprep.subr.bf16.mxu0 0
      %1029 = vmatpush1.bf16.xpose.msra.mxu0 0
      %1030 = vmatprep.subr.bf16.mxu0 0
      %1031 = vmatpush1.bf16.xpose.msra.mxu0 0
      %1032 = vmatprep.subr.bf16.mxu0 0
      %1033 = vmatpush1.bf16.xpose.msra.mxu0 0
      %1034 = vmatprep.subr.bf16.mxu0 0
      %1035 = vmatpush1.bf16.xpose.msra.mxu0 0
      %1036 = vmatprep.subr.bf16.mxu0 0
      %1037 = vmatpush1.bf16.xpose.msra.mxu0 0
      %1038 = vmatprep.subr.bf16.mxu0 0
      %1039 = vmatpush1.bf16.xpose.msra.mxu0 0
      %1040 = vmatprep.subr.bf16.mxu0 0
      %1041 = vmatpush1.bf16.xpose.msra.mxu0 0
      %1042 = vmatprep.subr.bf16.mxu0 0
      %1043 = vmatpush1.bf16.xpose.msra.mxu0 0
      %1044 = vmatprep.subr.bf16.mxu0 0
      %1045 = vmatpush1.bf16.xpose.msra.mxu0 0
      %1046 = vmatprep.subr.bf16.mxu0 0
      %1047 = vmatpush1.bf16.xpose.msra.mxu0 0
      %1048 = vmatprep.subr.bf16.mxu0 0
      %1049 = vmatpush1.bf16.xpose.msra.mxu0 0
      %1050 = vmatprep.subr.bf16.mxu0 0
      %1051 = vmatpush1.bf16.xpose.msra.mxu0 0
      %1052 = vmatprep.mubr.bf16.mxu0 0
      %1053 = vmatmul.mubr.bf16.gmra.mrb[0].mxu0 %v1015
      %v1054 = vpop.f32.mrb[0].mxu0
      %v1055 = vadd.f32 0.0, %v1054
      %v1056 = vpop.f32.mrb[0].mxu0
      %v1057 = vpop.f32.mrb[0].mxu0
      %v1058 = vadd.f32 0.0, %v1057
      %v1059 = vpop.f32.mrb[0].mxu0
      %1060 = vdwg.mxu0
      %1062 = vrot.lane.b32.xlu0 %v751, 112
      %v1063 = vpop.permute.xlu0 %1062
      %v1065 = vsel %vm326, %v751, 0
      %v1068 = vsel %vm326, %v1063, 0
      %1070 = vmatprep.subr.bf16.mxu0 0
      %1071 = vmatpush1.bf16.xpose.msra.mxu0 %v1068
      %1072 = vmatprep.subr.bf16.mxu0 0
      %1073 = vmatpush1.bf16.xpose.msra.mxu0 0
      %1074 = vmatprep.subr.bf16.mxu0 0
      %1075 = vmatpush1.bf16.xpose.msra.mxu0 0
      %1076 = vmatprep.subr.bf16.mxu0 0
      %1077 = vmatpush1.bf16.xpose.msra.mxu0 0
      %1078 = vmatprep.subr.bf16.mxu0 0
      %1079 = vmatpush1.bf16.xpose.msra.mxu0 0
      %1080 = vmatprep.subr.bf16.mxu0 0
      %1081 = vmatpush1.bf16.xpose.msra.mxu0 0
      %1082 = vmatprep.subr.bf16.mxu0 0
      %1083 = vmatpush1.bf16.xpose.msra.mxu0 0
      %1084 = vmatprep.subr.bf16.mxu0 0
      %1085 = vmatpush1.bf16.xpose.msra.mxu0 0
      %1086 = vmatprep.subr.bf16.mxu0 0
      %1087 = vmatpush1.bf16.xpose.msra.mxu0 0
      %1088 = vmatprep.subr.bf16.mxu0 0
      %1089 = vmatpush1.bf16.xpose.msra.mxu0 0
      %1090 = vmatprep.subr.bf16.mxu0 0
      %1091 = vmatpush1.bf16.xpose.msra.mxu0 0
      %1092 = vmatprep.subr.bf16.mxu0 0
      %1093 = vmatpush1.bf16.xpose.msra.mxu0 0
      %1094 = vmatprep.subr.bf16.mxu0 0
      %1095 = vmatpush1.bf16.xpose.msra.mxu0 0
      %1096 = vmatprep.subr.bf16.mxu0 0
      %1097 = vmatpush1.bf16.xpose.msra.mxu0 0
      %1098 = vmatprep.subr.bf16.mxu0 0
      %1099 = vmatpush1.bf16.xpose.msra.mxu0 0
      %1100 = vmatprep.subr.bf16.mxu0 0
      %1101 = vmatpush1.bf16.xpose.msra.mxu0 0
      %1102 = vmatprep.mubr.bf16.mxu0 0
      %1103 = vmatmul.mubr.bf16.gmra.mrb[0].mxu0 %v1065
      %v1104 = vpop.f32.mrb[0].mxu0
      %v1105 = vadd.f32 0.0, %v1104
      %v1106 = vpop.f32.mrb[0].mxu0
      %v1107 = vpop.f32.mrb[0].mxu0
      %v1108 = vadd.f32 0.0, %v1107
      %v1109 = vpop.f32.mrb[0].mxu0
      %1110 = vdwg.mxu0
      %1112 = vrot.lane.b32.xlu0 %v752, 112
      %v1113 = vpop.permute.xlu0 %1112
      %v1115 = vsel %vm326, %v752, 0
      %v1118 = vsel %vm326, %v1113, 0
      %1120 = vmatprep.subr.bf16.mxu0 0
      %1121 = vmatpush1.bf16.xpose.msra.mxu0 %v1118
      %1122 = vmatprep.subr.bf16.mxu0 0
      %1123 = vmatpush1.bf16.xpose.msra.mxu0 0
      %1124 = vmatprep.subr.bf16.mxu0 0
      %1125 = vmatpush1.bf16.xpose.msra.mxu0 0
      %1126 = vmatprep.subr.bf16.mxu0 0
      %1127 = vmatpush1.bf16.xpose.msra.mxu0 0
      %1128 = vmatprep.subr.bf16.mxu0 0
      %1129 = vmatpush1.bf16.xpose.msra.mxu0 0
      %1130 = vmatprep.subr.bf16.mxu0 0
      %1131 = vmatpush1.bf16.xpose.msra.mxu0 0
      %1132 = vmatprep.subr.bf16.mxu0 0
      %1133 = vmatpush1.bf16.xpose.msra.mxu0 0
      %1134 = vmatprep.subr.bf16.mxu0 0
      %1135 = vmatpush1.bf16.xpose.msra.mxu0 0
      %1136 = vmatprep.subr.bf16.mxu0 0
      %1137 = vmatpush1.bf16.xpose.msra.mxu0 0
      %1138 = vmatprep.subr.bf16.mxu0 0
      %1139 = vmatpush1.bf16.xpose.msra.mxu0 0
      %1140 = vmatprep.subr.bf16.mxu0 0
      %1141 = vmatpush1.bf16.xpose.msra.mxu0 0
      %1142 = vmatprep.subr.bf16.mxu0 0
      %1143 = vmatpush1.bf16.xpose.msra.mxu0 0
      %1144 = vmatprep.subr.bf16.mxu0 0
      %1145 = vmatpush1.bf16.xpose.msra.mxu0 0
      %1146 = vmatprep.subr.bf16.mxu0 0
      %1147 = vmatpush1.bf16.xpose.msra.mxu0 0
      %1148 = vmatprep.subr.bf16.mxu0 0
      %1149 = vmatpush1.bf16.xpose.msra.mxu0 0
      %1150 = vmatprep.subr.bf16.mxu0 0
      %1151 = vmatpush1.bf16.xpose.msra.mxu0 0
      %1152 = vmatprep.mubr.bf16.mxu0 0
      %1153 = vmatmul.mubr.bf16.gmra.mrb[0].mxu0 %v1115
      %v1154 = vpop.f32.mrb[0].mxu0
      %v1155 = vadd.f32 0.0, %v1154
      %v1156 = vpop.f32.mrb[0].mxu0
      %v1157 = vpop.f32.mrb[0].mxu0
      %v1158 = vadd.f32 0.0, %v1157
      %v1159 = vpop.f32.mrb[0].mxu0
      %1160 = vdwg.mxu0
      %1162 = vrot.lane.b32.xlu0 %v753, 112
      %v1163 = vpop.permute.xlu0 %1162
      %v1165 = vsel %vm326, %v753, 0
      %v1168 = vsel %vm326, %v1163, 0
      %1170 = vmatprep.subr.bf16.mxu0 0
      %1171 = vmatpush1.bf16.xpose.msra.mxu0 %v1168
      %1172 = vmatprep.subr.bf16.mxu0 0
      %1173 = vmatpush1.bf16.xpose.msra.mxu0 0
      %1174 = vmatprep.subr.bf16.mxu0 0
      %1175 = vmatpush1.bf16.xpose.msra.mxu0 0
      %1176 = vmatprep.subr.bf16.mxu0 0
      %1177 = vmatpush1.bf16.xpose.msra.mxu0 0
      %1178 = vmatprep.subr.bf16.mxu0 0
      %1179 = vmatpush1.bf16.xpose.msra.mxu0 0
      %1180 = vmatprep.subr.bf16.mxu0 0
      %1181 = vmatpush1.bf16.xpose.msra.mxu0 0
      %1182 = vmatprep.subr.bf16.mxu0 0
      %1183 = vmatpush1.bf16.xpose.msra.mxu0 0
      %1184 = vmatprep.subr.bf16.mxu0 0
      %1185 = vmatpush1.bf16.xpose.msra.mxu0 0
      %1186 = vmatprep.subr.bf16.mxu0 0
      %1187 = vmatpush1.bf16.xpose.msra.mxu0 0
      %1188 = vmatprep.subr.bf16.mxu0 0
      %1189 = vmatpush1.bf16.xpose.msra.mxu0 0
      %1190 = vmatprep.subr.bf16.mxu0 0
      %1191 = vmatpush1.bf16.xpose.msra.mxu0 0
      %1192 = vmatprep.subr.bf16.mxu0 0
      %1193 = vmatpush1.bf16.xpose.msra.mxu0 0
      %1194 = vmatprep.subr.bf16.mxu0 0
      %1195 = vmatpush1.bf16.xpose.msra.mxu0 0
      %1196 = vmatprep.subr.bf16.mxu0 0
      %1197 = vmatpush1.bf16.xpose.msra.mxu0 0
      %1198 = vmatprep.subr.bf16.mxu0 0
      %1199 = vmatpush1.bf16.xpose.msra.mxu0 0
      %1200 = vmatprep.subr.bf16.mxu0 0
      %1201 = vmatpush1.bf16.xpose.msra.mxu0 0
      %1202 = vmatprep.mubr.bf16.mxu0 0
      %1203 = vmatmul.mubr.bf16.gmra.mrb[0].mxu0 %v1165
      %v1204 = vpop.f32.mrb[0].mxu0
      %v1205 = vadd.f32 0.0, %v1204
      %v1206 = vpop.f32.mrb[0].mxu0
      %v1207 = vpop.f32.mrb[0].mxu0
      %v1208 = vadd.f32 0.0, %v1207
      %v1209 = vpop.f32.mrb[0].mxu0
      %1210 = vdwg.mxu0
      %1212 = vrot.lane.b32.xlu0 %v754, 112
      %v1213 = vpop.permute.xlu0 %1212
      %v1215 = vsel %vm326, %v754, 0
      %v1218 = vsel %vm326, %v1213, 0
      %1220 = vmatprep.subr.bf16.mxu0 0
      %1221 = vmatpush1.bf16.xpose.msra.mxu0 %v1218
      %1222 = vmatprep.subr.bf16.mxu0 0
      %1223 = vmatpush1.bf16.xpose.msra.mxu0 0
      %1224 = vmatprep.subr.bf16.mxu0 0
      %1225 = vmatpush1.bf16.xpose.msra.mxu0 0
      %1226 = vmatprep.subr.bf16.mxu0 0
      %1227 = vmatpush1.bf16.xpose.msra.mxu0 0
      %1228 = vmatprep.subr.bf16.mxu0 0
      %1229 = vmatpush1.bf16.xpose.msra.mxu0 0
      %1230 = vmatprep.subr.bf16.mxu0 0
      %1231 = vmatpush1.bf16.xpose.msra.mxu0 0
      %1232 = vmatprep.subr.bf16.mxu0 0
      %1233 = vmatpush1.bf16.xpose.msra.mxu0 0
      %1234 = vmatprep.subr.bf16.mxu0 0
      %1235 = vmatpush1.bf16.xpose.msra.mxu0 0
      %1236 = vmatprep.subr.bf16.mxu0 0
      %1237 = vmatpush1.bf16.xpose.msra.mxu0 0
      %1238 = vmatprep.subr.bf16.mxu0 0
      %1239 = vmatpush1.bf16.xpose.msra.mxu0 0
      %1240 = vmatprep.subr.bf16.mxu0 0
      %1241 = vmatpush1.bf16.xpose.msra.mxu0 0
      %1242 = vmatprep.subr.bf16.mxu0 0
      %1243 = vmatpush1.bf16.xpose.msra.mxu0 0
      %1244 = vmatprep.subr.bf16.mxu0 0
      %1245 = vmatpush1.bf16.xpose.msra.mxu0 0
      %1246 = vmatprep.subr.bf16.mxu0 0
      %1247 = vmatpush1.bf16.xpose.msra.mxu0 0
      %1248 = vmatprep.subr.bf16.mxu0 0
      %1249 = vmatpush1.bf16.xpose.msra.mxu0 0
      %1250 = vmatprep.subr.bf16.mxu0 0
      %1251 = vmatpush1.bf16.xpose.msra.mxu0 0
      %1252 = vmatprep.mubr.bf16.mxu0 0
      %1253 = vmatmul.mubr.bf16.gmra.mrb[0].mxu0 %v1215
      %v1254 = vpop.f32.mrb[0].mxu0
      %v1255 = vadd.f32 0.0, %v1254
      %v1256 = vpop.f32.mrb[0].mxu0
      %v1257 = vpop.f32.mrb[0].mxu0
      %v1258 = vadd.f32 0.0, %v1257
      %v1259 = vpop.f32.mrb[0].mxu0
      %1260 = vdwg.mxu0
      %1262 = vrot.lane.b32.xlu0 %v755, 112
      %v1263 = vpop.permute.xlu0 %1262
      %v1265 = vsel %vm326, %v755, 0
      %v1268 = vsel %vm326, %v1263, 0
      %1270 = vmatprep.subr.bf16.mxu0 0
      %1271 = vmatpush1.bf16.xpose.msra.mxu0 %v1268
      %1272 = vmatprep.subr.bf16.mxu0 0
      %1273 = vmatpush1.bf16.xpose.msra.mxu0 0
      %1274 = vmatprep.subr.bf16.mxu0 0
      %1275 = vmatpush1.bf16.xpose.msra.mxu0 0
      %1276 = vmatprep.subr.bf16.mxu0 0
      %1277 = vmatpush1.bf16.xpose.msra.mxu0 0
      %1278 = vmatprep.subr.bf16.mxu0 0
      %1279 = vmatpush1.bf16.xpose.msra.mxu0 0
      %1280 = vmatprep.subr.bf16.mxu0 0
      %1281 = vmatpush1.bf16.xpose.msra.mxu0 0
      %1282 = vmatprep.subr.bf16.mxu0 0
      %1283 = vmatpush1.bf16.xpose.msra.mxu0 0
      %1284 = vmatprep.subr.bf16.mxu0 0
      %1285 = vmatpush1.bf16.xpose.msra.mxu0 0
      %1286 = vmatprep.subr.bf16.mxu0 0
      %1287 = vmatpush1.bf16.xpose.msra.mxu0 0
      %1288 = vmatprep.subr.bf16.mxu0 0
      %1289 = vmatpush1.bf16.xpose.msra.mxu0 0
      %1290 = vmatprep.subr.bf16.mxu0 0
      %1291 = vmatpush1.bf16.xpose.msra.mxu0 0
      %1292 = vmatprep.subr.bf16.mxu0 0
      %1293 = vmatpush1.bf16.xpose.msra.mxu0 0
      %1294 = vmatprep.subr.bf16.mxu0 0
      %1295 = vmatpush1.bf16.xpose.msra.mxu0 0
      %1296 = vmatprep.subr.bf16.mxu0 0
      %1297 = vmatpush1.bf16.xpose.msra.mxu0 0
      %1298 = vmatprep.subr.bf16.mxu0 0
      %1299 = vmatpush1.bf16.xpose.msra.mxu0 0
      %1300 = vmatprep.subr.bf16.mxu0 0
      %1301 = vmatpush1.bf16.xpose.msra.mxu0 0
      %1302 = vmatprep.mubr.bf16.mxu0 0
      %1303 = vmatmul.mubr.bf16.gmra.mrb[0].mxu0 %v1265
      %v1304 = vpop.f32.mrb[0].mxu0
      %v1305 = vadd.f32 0.0, %v1304
      %v1306 = vpop.f32.mrb[0].mxu0
      %v1307 = vpop.f32.mrb[0].mxu0
      %v1308 = vadd.f32 0.0, %v1307
      %v1309 = vpop.f32.mrb[0].mxu0
      %1310 = vdwg.mxu0
      %1312 = vrot.lane.b32.xlu0 %v756, 112
      %v1313 = vpop.permute.xlu0 %1312
      %v1315 = vsel %vm326, %v756, 0
      %v1318 = vsel %vm326, %v1313, 0
      %1320 = vmatprep.subr.bf16.mxu0 0
      %1321 = vmatpush1.bf16.xpose.msra.mxu0 %v1318
      %1322 = vmatprep.subr.bf16.mxu0 0
      %1323 = vmatpush1.bf16.xpose.msra.mxu0 0
      %1324 = vmatprep.subr.bf16.mxu0 0
      %1325 = vmatpush1.bf16.xpose.msra.mxu0 0
      %1326 = vmatprep.subr.bf16.mxu0 0
      %1327 = vmatpush1.bf16.xpose.msra.mxu0 0
      %1328 = vmatprep.subr.bf16.mxu0 0
      %1329 = vmatpush1.bf16.xpose.msra.mxu0 0
      %1330 = vmatprep.subr.bf16.mxu0 0
      %1331 = vmatpush1.bf16.xpose.msra.mxu0 0
      %1332 = vmatprep.subr.bf16.mxu0 0
      %1333 = vmatpush1.bf16.xpose.msra.mxu0 0
      %1334 = vmatprep.subr.bf16.mxu0 0
      %1335 = vmatpush1.bf16.xpose.msra.mxu0 0
      %1336 = vmatprep.subr.bf16.mxu0 0
      %1337 = vmatpush1.bf16.xpose.msra.mxu0 0
      %1338 = vmatprep.subr.bf16.mxu0 0
      %1339 = vmatpush1.bf16.xpose.msra.mxu0 0
      %1340 = vmatprep.subr.bf16.mxu0 0
      %1341 = vmatpush1.bf16.xpose.msra.mxu0 0
      %1342 = vmatprep.subr.bf16.mxu0 0
      %1343 = vmatpush1.bf16.xpose.msra.mxu0 0
      %1344 = vmatprep.subr.bf16.mxu0 0
      %1345 = vmatpush1.bf16.xpose.msra.mxu0 0
      %1346 = vmatprep.subr.bf16.mxu0 0
      %1347 = vmatpush1.bf16.xpose.msra.mxu0 0
      %1348 = vmatprep.subr.bf16.mxu0 0
      %1349 = vmatpush1.bf16.xpose.msra.mxu0 0
      %1350 = vmatprep.subr.bf16.mxu0 0
      %1351 = vmatpush1.bf16.xpose.msra.mxu0 0
      %1352 = vmatprep.mubr.bf16.mxu0 0
      %1353 = vmatmul.mubr.bf16.gmra.mrb[0].mxu0 %v1315
      %v1354 = vpop.f32.mrb[0].mxu0
      %v1355 = vadd.f32 0.0, %v1354
      %v1356 = vpop.f32.mrb[0].mxu0
      %v1357 = vpop.f32.mrb[0].mxu0
      %v1358 = vadd.f32 0.0, %v1357
      %v1359 = vpop.f32.mrb[0].mxu0
      %1360 = vdwg.mxu0
      %1362 = vrot.lane.b32.xlu0 %v757, 112
      %v1363 = vpop.permute.xlu0 %1362
      %v1365 = vsel %vm326, %v757, 0
      %v1368 = vsel %vm326, %v1363, 0
      %1370 = vmatprep.subr.bf16.mxu0 0
      %1371 = vmatpush1.bf16.xpose.msra.mxu0 %v1368
      %1372 = vmatprep.subr.bf16.mxu0 0
      %1373 = vmatpush1.bf16.xpose.msra.mxu0 0
      %1374 = vmatprep.subr.bf16.mxu0 0
      %1375 = vmatpush1.bf16.xpose.msra.mxu0 0
      %1376 = vmatprep.subr.bf16.mxu0 0
      %1377 = vmatpush1.bf16.xpose.msra.mxu0 0
      %1378 = vmatprep.subr.bf16.mxu0 0
      %1379 = vmatpush1.bf16.xpose.msra.mxu0 0
      %1380 = vmatprep.subr.bf16.mxu0 0
      %1381 = vmatpush1.bf16.xpose.msra.mxu0 0
      %1382 = vmatprep.subr.bf16.mxu0 0
      %1383 = vmatpush1.bf16.xpose.msra.mxu0 0
      %1384 = vmatprep.subr.bf16.mxu0 0
      %1385 = vmatpush1.bf16.xpose.msra.mxu0 0
      %1386 = vmatprep.subr.bf16.mxu0 0
      %1387 = vmatpush1.bf16.xpose.msra.mxu0 0
      %1388 = vmatprep.subr.bf16.mxu0 0
      %1389 = vmatpush1.bf16.xpose.msra.mxu0 0
      %1390 = vmatprep.subr.bf16.mxu0 0
      %1391 = vmatpush1.bf16.xpose.msra.mxu0 0
      %1392 = vmatprep.subr.bf16.mxu0 0
      %1393 = vmatpush1.bf16.xpose.msra.mxu0 0
      %1394 = vmatprep.subr.bf16.mxu0 0
      %1395 = vmatpush1.bf16.xpose.msra.mxu0 0
      %1396 = vmatprep.subr.bf16.mxu0 0
      %1397 = vmatpush1.bf16.xpose.msra.mxu0 0
      %1398 = vmatprep.subr.bf16.mxu0 0
      %1399 = vmatpush1.bf16.xpose.msra.mxu0 0
      %1400 = vmatprep.subr.bf16.mxu0 0
      %1401 = vmatpush1.bf16.xpose.msra.mxu0 0
      %1402 = vmatprep.mubr.bf16.mxu0 0
      %1403 = vmatmul.mubr.bf16.gmra.mrb[0].mxu0 %v1365
      %v1404 = vpop.f32.mrb[0].mxu0
      %v1405 = vadd.f32 0.0, %v1404
      %v1406 = vpop.f32.mrb[0].mxu0
      %v1407 = vpop.f32.mrb[0].mxu0
      %v1408 = vadd.f32 0.0, %v1407
      %v1409 = vpop.f32.mrb[0].mxu0
      %1410 = vdwg.mxu0
      %1412 = vrot.lane.b32.xlu0 %v758, 112
      %v1413 = vpop.permute.xlu0 %1412
      %v1415 = vsel %vm326, %v758, 0
      %v1418 = vsel %vm326, %v1413, 0
      %1420 = vmatprep.subr.bf16.mxu0 0
      %1421 = vmatpush1.bf16.xpose.msra.mxu0 %v1418
      %1422 = vmatprep.subr.bf16.mxu0 0
      %1423 = vmatpush1.bf16.xpose.msra.mxu0 0
      %1424 = vmatprep.subr.bf16.mxu0 0
      %1425 = vmatpush1.bf16.xpose.msra.mxu0 0
      %1426 = vmatprep.subr.bf16.mxu0 0
      %1427 = vmatpush1.bf16.xpose.msra.mxu0 0
      %1428 = vmatprep.subr.bf16.mxu0 0
      %1429 = vmatpush1.bf16.xpose.msra.mxu0 0
      %1430 = vmatprep.subr.bf16.mxu0 0
      %1431 = vmatpush1.bf16.xpose.msra.mxu0 0
      %1432 = vmatprep.subr.bf16.mxu0 0
      %1433 = vmatpush1.bf16.xpose.msra.mxu0 0
      %1434 = vmatprep.subr.bf16.mxu0 0
      %1435 = vmatpush1.bf16.xpose.msra.mxu0 0
      %1436 = vmatprep.subr.bf16.mxu0 0
      %1437 = vmatpush1.bf16.xpose.msra.mxu0 0
      %1438 = vmatprep.subr.bf16.mxu0 0
      %1439 = vmatpush1.bf16.xpose.msra.mxu0 0
      %1440 = vmatprep.subr.bf16.mxu0 0
      %1441 = vmatpush1.bf16.xpose.msra.mxu0 0
      %1442 = vmatprep.subr.bf16.mxu0 0
      %1443 = vmatpush1.bf16.xpose.msra.mxu0 0
      %1444 = vmatprep.subr.bf16.mxu0 0
      %1445 = vmatpush1.bf16.xpose.msra.mxu0 0
      %1446 = vmatprep.subr.bf16.mxu0 0
      %1447 = vmatpush1.bf16.xpose.msra.mxu0 0
      %1448 = vmatprep.subr.bf16.mxu0 0
      %1449 = vmatpush1.bf16.xpose.msra.mxu0 0
      %1450 = vmatprep.subr.bf16.mxu0 0
      %1451 = vmatpush1.bf16.xpose.msra.mxu0 0
      %1452 = vmatprep.mubr.bf16.mxu0 0
      %1453 = vmatmul.mubr.bf16.gmra.mrb[0].mxu0 %v1415
      %v1454 = vpop.f32.mrb[0].mxu0
      %v1455 = vadd.f32 0.0, %v1454
      %v1456 = vpop.f32.mrb[0].mxu0
      %v1457 = vpop.f32.mrb[0].mxu0
      %v1458 = vadd.f32 0.0, %v1457
      %v1459 = vpop.f32.mrb[0].mxu0
      %1460 = vdwg.mxu0
      %1462 = vrot.lane.b32.xlu0 %v759, 112
      %v1463 = vpop.permute.xlu0 %1462
      %v1465 = vsel %vm326, %v759, 0
      %v1468 = vsel %vm326, %v1463, 0
      %1470 = vmatprep.subr.bf16.mxu0 0
      %1471 = vmatpush1.bf16.xpose.msra.mxu0 %v1468
      %1472 = vmatprep.subr.bf16.mxu0 0
      %1473 = vmatpush1.bf16.xpose.msra.mxu0 0
      %1474 = vmatprep.subr.bf16.mxu0 0
      %1475 = vmatpush1.bf16.xpose.msra.mxu0 0
      %1476 = vmatprep.subr.bf16.mxu0 0
      %1477 = vmatpush1.bf16.xpose.msra.mxu0 0
      %1478 = vmatprep.subr.bf16.mxu0 0
      %1479 = vmatpush1.bf16.xpose.msra.mxu0 0
      %1480 = vmatprep.subr.bf16.mxu0 0
      %1481 = vmatpush1.bf16.xpose.msra.mxu0 0
      %1482 = vmatprep.subr.bf16.mxu0 0
      %1483 = vmatpush1.bf16.xpose.msra.mxu0 0
      %1484 = vmatprep.subr.bf16.mxu0 0
      %1485 = vmatpush1.bf16.xpose.msra.mxu0 0
      %1486 = vmatprep.subr.bf16.mxu0 0
      %1487 = vmatpush1.bf16.xpose.msra.mxu0 0
      %1488 = vmatprep.subr.bf16.mxu0 0
      %1489 = vmatpush1.bf16.xpose.msra.mxu0 0
      %1490 = vmatprep.subr.bf16.mxu0 0
      %1491 = vmatpush1.bf16.xpose.msra.mxu0 0
      %1492 = vmatprep.subr.bf16.mxu0 0
      %1493 = vmatpush1.bf16.xpose.msra.mxu0 0
      %1494 = vmatprep.subr.bf16.mxu0 0
      %1495 = vmatpush1.bf16.xpose.msra.mxu0 0
      %1496 = vmatprep.subr.bf16.mxu0 0
      %1497 = vmatpush1.bf16.xpose.msra.mxu0 0
      %1498 = vmatprep.subr.bf16.mxu0 0
      %1499 = vmatpush1.bf16.xpose.msra.mxu0 0
      %1500 = vmatprep.subr.bf16.mxu0 0
      %1501 = vmatpush1.bf16.xpose.msra.mxu0 0
      %1502 = vmatprep.mubr.bf16.mxu0 0
      %1503 = vmatmul.mubr.bf16.gmra.mrb[0].mxu0 %v1465
      %v1504 = vpop.f32.mrb[0].mxu0
      %v1505 = vadd.f32 0.0, %v1504
      %v1506 = vpop.f32.mrb[0].mxu0
      %v1507 = vpop.f32.mrb[0].mxu0
      %v1508 = vadd.f32 0.0, %v1507
      %v1509 = vpop.f32.mrb[0].mxu0
      %1510 = vdwg.mxu0
      %1512 = vrot.lane.b32.xlu0 %v760, 112
      %v1513 = vpop.permute.xlu0 %1512
      %v1515 = vsel %vm326, %v760, 0
      %v1518 = vsel %vm326, %v1513, 0
      %1520 = vmatprep.subr.bf16.mxu0 0
      %1521 = vmatpush1.bf16.xpose.msra.mxu0 %v1518
      %1522 = vmatprep.subr.bf16.mxu0 0
      %1523 = vmatpush1.bf16.xpose.msra.mxu0 0
      %1524 = vmatprep.subr.bf16.mxu0 0
      %1525 = vmatpush1.bf16.xpose.msra.mxu0 0
      %1526 = vmatprep.subr.bf16.mxu0 0
      %1527 = vmatpush1.bf16.xpose.msra.mxu0 0
      %1528 = vmatprep.subr.bf16.mxu0 0
      %1529 = vmatpush1.bf16.xpose.msra.mxu0 0
      %1530 = vmatprep.subr.bf16.mxu0 0
      %1531 = vmatpush1.bf16.xpose.msra.mxu0 0
      %1532 = vmatprep.subr.bf16.mxu0 0
      %1533 = vmatpush1.bf16.xpose.msra.mxu0 0
      %1534 = vmatprep.subr.bf16.mxu0 0
      %1535 = vmatpush1.bf16.xpose.msra.mxu0 0
      %1536 = vmatprep.subr.bf16.mxu0 0
      %1537 = vmatpush1.bf16.xpose.msra.mxu0 0
      %1538 = vmatprep.subr.bf16.mxu0 0
      %1539 = vmatpush1.bf16.xpose.msra.mxu0 0
      %1540 = vmatprep.subr.bf16.mxu0 0
      %1541 = vmatpush1.bf16.xpose.msra.mxu0 0
      %1542 = vmatprep.subr.bf16.mxu0 0
      %1543 = vmatpush1.bf16.xpose.msra.mxu0 0
      %1544 = vmatprep.subr.bf16.mxu0 0
      %1545 = vmatpush1.bf16.xpose.msra.mxu0 0
      %1546 = vmatprep.subr.bf16.mxu0 0
      %1547 = vmatpush1.bf16.xpose.msra.mxu0 0
      %1548 = vmatprep.subr.bf16.mxu0 0
      %1549 = vmatpush1.bf16.xpose.msra.mxu0 0
      %1550 = vmatprep.subr.bf16.mxu0 0
      %1551 = vmatpush1.bf16.xpose.msra.mxu0 0
      %1552 = vmatprep.mubr.bf16.mxu0 0
      %1553 = vmatmul.mubr.bf16.gmra.mrb[0].mxu0 %v1515
      %v1554 = vpop.f32.mrb[0].mxu0
      %v1555 = vadd.f32 0.0, %v1554
      %v1556 = vpop.f32.mrb[0].mxu0
      %v1557 = vpop.f32.mrb[0].mxu0
      %v1558 = vadd.f32 0.0, %v1557
      %v1559 = vpop.f32.mrb[0].mxu0
      %1560 = vdwg.mxu0
      %v1561 = vmul.f32 %v805, %v293
      %v1562 = vmul.f32 %v808, %v294
      %v1563 = vmul.f32 %v855, %v293
      %v1564 = vmul.f32 %v858, %v294
      %v1565 = vmul.f32 %v905, %v293
      %v1566 = vmul.f32 %v908, %v294
      %v1567 = vmul.f32 %v955, %v293
      %v1568 = vmul.f32 %v958, %v294
      %v1569 = vmul.f32 %v1005, %v293
      %v1570 = vmul.f32 %v1008, %v294
      %v1571 = vmul.f32 %v1055, %v293
      %v1572 = vmul.f32 %v1058, %v294
      %v1573 = vmul.f32 %v1105, %v293
      %v1574 = vmul.f32 %v1108, %v294
      %v1575 = vmul.f32 %v1155, %v293
      %v1576 = vmul.f32 %v1158, %v294
      %v1577 = vmul.f32 %v1205, %v293
      %v1578 = vmul.f32 %v1208, %v294
      %v1579 = vmul.f32 %v1255, %v293
      %v1580 = vmul.f32 %v1258, %v294
      %v1581 = vmul.f32 %v1305, %v293
      %v1582 = vmul.f32 %v1308, %v294
      %v1583 = vmul.f32 %v1355, %v293
      %v1584 = vmul.f32 %v1358, %v294
      %v1585 = vmul.f32 %v1405, %v293
      %v1586 = vmul.f32 %v1408, %v294
      %v1587 = vmul.f32 %v1455, %v293
      %v1588 = vmul.f32 %v1458, %v294
      %v1589 = vmul.f32 %v1505, %v293
      %v1590 = vmul.f32 %v1508, %v294
      %v1591 = vmul.f32 %v1555, %v293
      %v1592 = vmul.f32 %v1558, %v294
      %v1593 = vsel %vm326, %v1561, 0.0
      %1594 = vadd.xlane.f32.xlu0 %v1593
      %v1595 = vpop.xlane.xlu0 %1594
      %v1596 = vsel %vm326, %v1562, 0.0
      %1597 = vadd.xlane.f32.xlu0 %v1596
      %v1598 = vpop.xlane.xlu0 %1597
      %v1599 = vsel %vm326, %v1563, 0.0
      %1600 = vadd.xlane.f32.xlu0 %v1599
      %v1601 = vpop.xlane.xlu0 %1600
      %v1602 = vsel %vm326, %v1564, 0.0
      %1603 = vadd.xlane.f32.xlu0 %v1602
      %v1604 = vpop.xlane.xlu0 %1603
      %v1605 = vsel %vm326, %v1565, 0.0
      %1606 = vadd.xlane.f32.xlu0 %v1605
      %v1607 = vpop.xlane.xlu0 %1606
      %v1608 = vsel %vm326, %v1566, 0.0
      %1609 = vadd.xlane.f32.xlu0 %v1608
      %v1610 = vpop.xlane.xlu0 %1609
      %v1611 = vsel %vm326, %v1567, 0.0
      %1612 = vadd.xlane.f32.xlu0 %v1611
      %v1613 = vpop.xlane.xlu0 %1612
      %v1614 = vsel %vm326, %v1568, 0.0
      %1615 = vadd.xlane.f32.xlu0 %v1614
      %v1616 = vpop.xlane.xlu0 %1615
      %v1617 = vsel %vm326, %v1569, 0.0
      %1618 = vadd.xlane.f32.xlu0 %v1617
      %v1619 = vpop.xlane.xlu0 %1618
      %v1620 = vsel %vm326, %v1570, 0.0
      %1621 = vadd.xlane.f32.xlu0 %v1620
      %v1622 = vpop.xlane.xlu0 %1621
      %v1623 = vsel %vm326, %v1571, 0.0
      %1624 = vadd.xlane.f32.xlu0 %v1623
      %v1625 = vpop.xlane.xlu0 %1624
      %v1626 = vsel %vm326, %v1572, 0.0
      %1627 = vadd.xlane.f32.xlu0 %v1626
      %v1628 = vpop.xlane.xlu0 %1627
      %v1629 = vsel %vm326, %v1573, 0.0
      %1630 = vadd.xlane.f32.xlu0 %v1629
      %v1631 = vpop.xlane.xlu0 %1630
      %v1632 = vsel %vm326, %v1574, 0.0
      %1633 = vadd.xlane.f32.xlu0 %v1632
      %v1634 = vpop.xlane.xlu0 %1633
      %v1635 = vsel %vm326, %v1575, 0.0
      %1636 = vadd.xlane.f32.xlu0 %v1635
      %v1637 = vpop.xlane.xlu0 %1636
      %v1638 = vsel %vm326, %v1576, 0.0
      %1639 = vadd.xlane.f32.xlu0 %v1638
      %v1640 = vpop.xlane.xlu0 %1639
      %v1641 = vsel %vm326, %v1577, 0.0
      %1642 = vadd.xlane.f32.xlu0 %v1641
      %v1643 = vpop.xlane.xlu0 %1642
      %v1644 = vsel %vm326, %v1578, 0.0
      %1645 = vadd.xlane.f32.xlu0 %v1644
      %v1646 = vpop.xlane.xlu0 %1645
      %v1647 = vsel %vm326, %v1579, 0.0
      %1648 = vadd.xlane.f32.xlu0 %v1647
      %v1649 = vpop.xlane.xlu0 %1648
      %v1650 = vsel %vm326, %v1580, 0.0
      %1651 = vadd.xlane.f32.xlu0 %v1650
      %v1652 = vpop.xlane.xlu0 %1651
      %v1653 = vsel %vm326, %v1581, 0.0
      %1654 = vadd.xlane.f32.xlu0 %v1653
      %v1655 = vpop.xlane.xlu0 %1654
      %v1656 = vsel %vm326, %v1582, 0.0
      %1657 = vadd.xlane.f32.xlu0 %v1656
      %v1658 = vpop.xlane.xlu0 %1657
      %v1659 = vsel %vm326, %v1583, 0.0
      %1660 = vadd.xlane.f32.xlu0 %v1659
      %v1661 = vpop.xlane.xlu0 %1660
      %v1662 = vsel %vm326, %v1584, 0.0
      %1663 = vadd.xlane.f32.xlu0 %v1662
      %v1664 = vpop.xlane.xlu0 %1663
      %v1665 = vsel %vm326, %v1585, 0.0
      %1666 = vadd.xlane.f32.xlu0 %v1665
      %v1667 = vpop.xlane.xlu0 %1666
      %v1668 = vsel %vm326, %v1586, 0.0
      %1669 = vadd.xlane.f32.xlu0 %v1668
      %v1670 = vpop.xlane.xlu0 %1669
      %v1671 = vsel %vm326, %v1587, 0.0
      %1672 = vadd.xlane.f32.xlu0 %v1671
      %v1673 = vpop.xlane.xlu0 %1672
      %v1674 = vsel %vm326, %v1588, 0.0
      %1675 = vadd.xlane.f32.xlu0 %v1674
      %v1676 = vpop.xlane.xlu0 %1675
      %v1677 = vsel %vm326, %v1589, 0.0
      %1678 = vadd.xlane.f32.xlu0 %v1677
      %v1679 = vpop.xlane.xlu0 %1678
      %v1680 = vsel %vm326, %v1590, 0.0
      %1681 = vadd.xlane.f32.xlu0 %v1680
      %v1682 = vpop.xlane.xlu0 %1681
      %v1683 = vsel %vm326, %v1591, 0.0
      %1684 = vadd.xlane.f32.xlu0 %v1683
      %v1685 = vpop.xlane.xlu0 %1684
      %v1686 = vsel %vm326, %v1592, 0.0
      %1687 = vadd.xlane.f32.xlu0 %v1686
      %v1688 = vpop.xlane.xlu0 %1687
      %v1689 = vadd.f32 %v1595, 1e-06
      %v1690 = vadd.f32 %v1598, 1e-06
      %v1691 = vadd.f32 %v1601, 1e-06
      %v1692 = vadd.f32 %v1604, 1e-06
      %v1693 = vadd.f32 %v1607, 1e-06
      %v1694 = vadd.f32 %v1610, 1e-06
      %v1695 = vadd.f32 %v1613, 1e-06
      %v1696 = vadd.f32 %v1616, 1e-06
      %v1697 = vadd.f32 %v1619, 1e-06
      %v1698 = vadd.f32 %v1622, 1e-06
      %v1699 = vadd.f32 %v1625, 1e-06
      %v1700 = vadd.f32 %v1628, 1e-06
      %v1701 = vadd.f32 %v1631, 1e-06
      %v1702 = vadd.f32 %v1634, 1e-06
      %v1703 = vadd.f32 %v1637, 1e-06
      %v1704 = vadd.f32 %v1640, 1e-06
      %v1705 = vadd.f32 %v1643, 1e-06
      %v1706 = vadd.f32 %v1646, 1e-06
      %v1707 = vadd.f32 %v1649, 1e-06
      %v1708 = vadd.f32 %v1652, 1e-06
      %v1709 = vadd.f32 %v1655, 1e-06
      %v1710 = vadd.f32 %v1658, 1e-06
      %v1711 = vadd.f32 %v1661, 1e-06
      %v1712 = vadd.f32 %v1664, 1e-06
      %v1713 = vadd.f32 %v1667, 1e-06
      %v1714 = vadd.f32 %v1670, 1e-06
      %v1715 = vadd.f32 %v1673, 1e-06
      %v1716 = vadd.f32 %v1676, 1e-06
      %v1717 = vadd.f32 %v1679, 1e-06
      %v1718 = vadd.f32 %v1682, 1e-06
      %v1719 = vadd.f32 %v1685, 1e-06
      %v1720 = vadd.f32 %v1688, 1e-06
      %v1721 = vrcp.pop %v1689
      %v1722 = vmul.f32 1.0, %v1721
      %v1723 = vrcp.pop %v1690
      %v1724 = vmul.f32 1.0, %v1723
      %v1725 = vrcp.pop %v1691
      %v1726 = vmul.f32 1.0, %v1725
      %v1727 = vrcp.pop %v1692
      %v1728 = vmul.f32 1.0, %v1727
      %v1729 = vrcp.pop %v1693
      %v1730 = vmul.f32 1.0, %v1729
      %v1731 = vrcp.pop %v1694
      %v1732 = vmul.f32 1.0, %v1731
      %v1733 = vrcp.pop %v1695
      %v1734 = vmul.f32 1.0, %v1733
      %v1735 = vrcp.pop %v1696
      %v1736 = vmul.f32 1.0, %v1735
      %v1737 = vrcp.pop %v1697
      %v1738 = vmul.f32 1.0, %v1737
      %v1739 = vrcp.pop %v1698
      %v1740 = vmul.f32 1.0, %v1739
      %v1741 = vrcp.pop %v1699
      %v1742 = vmul.f32 1.0, %v1741
      %v1743 = vrcp.pop %v1700
      %v1744 = vmul.f32 1.0, %v1743
      %v1745 = vrcp.pop %v1701
      %v1746 = vmul.f32 1.0, %v1745
      %v1747 = vrcp.pop %v1702
      %v1748 = vmul.f32 1.0, %v1747
      %v1749 = vrcp.pop %v1703
      %v1750 = vmul.f32 1.0, %v1749
      %v1751 = vrcp.pop %v1704
      %v1752 = vmul.f32 1.0, %v1751
      %v1753 = vrcp.pop %v1705
      %v1754 = vmul.f32 1.0, %v1753
      %v1755 = vrcp.pop %v1706
      %v1756 = vmul.f32 1.0, %v1755
      %v1757 = vrcp.pop %v1707
      %v1758 = vmul.f32 1.0, %v1757
      %v1759 = vrcp.pop %v1708
      %v1760 = vmul.f32 1.0, %v1759
      %v1761 = vrcp.pop %v1709
      %v1762 = vmul.f32 1.0, %v1761
      %v1763 = vrcp.pop %v1710
      %v1764 = vmul.f32 1.0, %v1763
      %v1765 = vrcp.pop %v1711
      %v1766 = vmul.f32 1.0, %v1765
      %v1767 = vrcp.pop %v1712
      %v1768 = vmul.f32 1.0, %v1767
      %v1769 = vrcp.pop %v1713
      %v1770 = vmul.f32 1.0, %v1769
      %v1771 = vrcp.pop %v1714
      %v1772 = vmul.f32 1.0, %v1771
      %v1773 = vrcp.pop %v1715
      %v1774 = vmul.f32 1.0, %v1773
      %v1775 = vrcp.pop %v1716
      %v1776 = vmul.f32 1.0, %v1775
      %v1777 = vrcp.pop %v1717
      %v1778 = vmul.f32 1.0, %v1777
      %v1779 = vrcp.pop %v1718
      %v1780 = vmul.f32 1.0, %v1779
      %v1781 = vrcp.pop %v1719
      %v1782 = vmul.f32 1.0, %v1781
      %v1783 = vrcp.pop %v1720
      %v1784 = vmul.f32 1.0, %v1783
      %1817 = vset.pattern.permute.xlu0 0
      %1818 = vperm.xlu0 %1817, %v713
      %v1819 = vpop.permute.xlu0 %1818
      %1820 = vset.pattern.permute.xlu0 0
      %1821 = vperm.xlu0 %1820, %v714
      %v1822 = vpop.permute.xlu0 %1821
      %1823 = vset.pattern.permute.xlu0 0
      %1824 = vperm.xlu0 %1823, %v715
      %v1825 = vpop.permute.xlu0 %1824
      %1826 = vset.pattern.permute.xlu0 0
      %1827 = vperm.xlu0 %1826, %v716
      %v1828 = vpop.permute.xlu0 %1827
      %1829 = vset.pattern.permute.xlu0 0
      %1830 = vperm.xlu0 %1829, %v717
      %v1831 = vpop.permute.xlu0 %1830
      %1832 = vset.pattern.permute.xlu0 0
      %1833 = vperm.xlu0 %1832, %v718
      %v1834 = vpop.permute.xlu0 %1833
      %1835 = vset.pattern.permute.xlu0 0
      %1836 = vperm.xlu0 %1835, %v719
      %v1837 = vpop.permute.xlu0 %1836
      %1838 = vset.pattern.permute.xlu0 0
      %1839 = vperm.xlu0 %1838, %v720
      %v1840 = vpop.permute.xlu0 %1839
      %1841 = vset.pattern.permute.xlu0 0
      %1842 = vperm.xlu0 %1841, %v721
      %v1843 = vpop.permute.xlu0 %1842
      %1844 = vset.pattern.permute.xlu0 0
      %1845 = vperm.xlu0 %1844, %v722
      %v1846 = vpop.permute.xlu0 %1845
      %1847 = vset.pattern.permute.xlu0 0
      %1848 = vperm.xlu0 %1847, %v723
      %v1849 = vpop.permute.xlu0 %1848
      %1850 = vset.pattern.permute.xlu0 0
      %1851 = vperm.xlu0 %1850, %v724
      %v1852 = vpop.permute.xlu0 %1851
      %1853 = vset.pattern.permute.xlu0 0
      %1854 = vperm.xlu0 %1853, %v725
      %v1855 = vpop.permute.xlu0 %1854
      %1856 = vset.pattern.permute.xlu0 0
      %1857 = vperm.xlu0 %1856, %v726
      %v1858 = vpop.permute.xlu0 %1857
      %1859 = vset.pattern.permute.xlu0 0
      %1860 = vperm.xlu0 %1859, %v727
      %v1861 = vpop.permute.xlu0 %1860
      %1862 = vset.pattern.permute.xlu0 0
      %1863 = vperm.xlu0 %1862, %v728
      %v1864 = vpop.permute.xlu0 %1863
      %1865 = vset.pattern.permute.xlu0 0
      %1866 = vperm.xlu0 %1865, %v729
      %v1867 = vpop.permute.xlu0 %1866
      %1868 = vset.pattern.permute.xlu0 0
      %1869 = vperm.xlu0 %1868, %v730
      %v1870 = vpop.permute.xlu0 %1869
      %1871 = vset.pattern.permute.xlu0 0
      %1872 = vperm.xlu0 %1871, %v731
      %v1873 = vpop.permute.xlu0 %1872
      %1874 = vset.pattern.permute.xlu0 0
      %1875 = vperm.xlu0 %1874, %v732
      %v1876 = vpop.permute.xlu0 %1875
      %1877 = vset.pattern.permute.xlu0 0
      %1878 = vperm.xlu0 %1877, %v733
      %v1879 = vpop.permute.xlu0 %1878
      %1880 = vset.pattern.permute.xlu0 0
      %1881 = vperm.xlu0 %1880, %v734
      %v1882 = vpop.permute.xlu0 %1881
      %1883 = vset.pattern.permute.xlu0 0
      %1884 = vperm.xlu0 %1883, %v735
      %v1885 = vpop.permute.xlu0 %1884
      %1886 = vset.pattern.permute.xlu0 0
      %1887 = vperm.xlu0 %1886, %v736
      %v1888 = vpop.permute.xlu0 %1887
      %1889 = vset.pattern.permute.xlu0 0
      %1890 = vperm.xlu0 %1889, %v737
      %v1891 = vpop.permute.xlu0 %1890
      %1892 = vset.pattern.permute.xlu0 0
      %1893 = vperm.xlu0 %1892, %v738
      %v1894 = vpop.permute.xlu0 %1893
      %1895 = vset.pattern.permute.xlu0 0
      %1896 = vperm.xlu0 %1895, %v739
      %v1897 = vpop.permute.xlu0 %1896
      %1898 = vset.pattern.permute.xlu0 0
      %1899 = vperm.xlu0 %1898, %v740
      %v1900 = vpop.permute.xlu0 %1899
      %1901 = vset.pattern.permute.xlu0 0
      %1902 = vperm.xlu0 %1901, %v741
      %v1903 = vpop.permute.xlu0 %1902
      %1904 = vset.pattern.permute.xlu0 0
      %1905 = vperm.xlu0 %1904, %v742
      %v1906 = vpop.permute.xlu0 %1905
      %1907 = vset.pattern.permute.xlu0 0
      %1908 = vperm.xlu0 %1907, %v743
      %v1909 = vpop.permute.xlu0 %1908
      %1910 = vset.pattern.permute.xlu0 0
      %1911 = vperm.xlu0 %1910, %v744
      %v1912 = vpop.permute.xlu0 %1911
      %v1913 = vlaneseq
      %v1914 = vand.u32 %v1913, 127
      %v1915 = vlaneseq
      %v1916 = vshrl.u32 %v1915, 7
      %v1917 = vsub.s32 %v1914, %v1916
      %v1918 = vrot.slane %v1819, %v1917
      %v1919 = vadd.s32 %v1914, 4294967288
      %v1920 = vlaneseq
      %v1921 = vshrl.u32 %v1920, 7
      %v1922 = vsub.s32 %v1919, %v1921
      %v1923 = vrot.slane %v1822, %v1922
      %vm1924 = vcmask 130112
      %v1925 = vsel %vm1924, %v1923, %v1918
      %v1926 = vlaneseq
      %v1927 = vshrl.u32 %v1926, 7
      %v1928 = vsub.s32 %v1914, %v1927
      %v1929 = vrot.slane %v1825, %v1928
      %v1930 = vlaneseq
      %v1931 = vshrl.u32 %v1930, 7
      %v1932 = vsub.s32 %v1919, %v1931
      %v1933 = vrot.slane %v1828, %v1932
      %v1934 = vsel %vm1924, %v1933, %v1929
      %v1935 = vlaneseq
      %v1936 = vshrl.u32 %v1935, 7
      %v1937 = vsub.s32 %v1914, %v1936
      %v1938 = vrot.slane %v1831, %v1937
      %v1939 = vlaneseq
      %v1940 = vshrl.u32 %v1939, 7
      %v1941 = vsub.s32 %v1919, %v1940
      %v1942 = vrot.slane %v1834, %v1941
      %v1943 = vsel %vm1924, %v1942, %v1938
      %v1944 = vlaneseq
      %v1945 = vshrl.u32 %v1944, 7
      %v1946 = vsub.s32 %v1914, %v1945
      %v1947 = vrot.slane %v1837, %v1946
      %v1948 = vlaneseq
      %v1949 = vshrl.u32 %v1948, 7
      %v1950 = vsub.s32 %v1919, %v1949
      %v1951 = vrot.slane %v1840, %v1950
      %v1952 = vsel %vm1924, %v1951, %v1947
      %v1953 = vlaneseq
      %v1954 = vshrl.u32 %v1953, 7
      %v1955 = vsub.s32 %v1914, %v1954
      %v1956 = vrot.slane %v1843, %v1955
      %v1957 = vlaneseq
      %v1958 = vshrl.u32 %v1957, 7
      %v1959 = vsub.s32 %v1919, %v1958
      %v1960 = vrot.slane %v1846, %v1959
      %v1961 = vsel %vm1924, %v1960, %v1956
      %v1962 = vlaneseq
      %v1963 = vshrl.u32 %v1962, 7
      %v1964 = vsub.s32 %v1914, %v1963
      %v1965 = vrot.slane %v1849, %v1964
      %v1966 = vlaneseq
      %v1967 = vshrl.u32 %v1966, 7
      %v1968 = vsub.s32 %v1919, %v1967
      %v1969 = vrot.slane %v1852, %v1968
      %v1970 = vsel %vm1924, %v1969, %v1965
      %v1971 = vlaneseq
      %v1972 = vshrl.u32 %v1971, 7
      %v1973 = vsub.s32 %v1914, %v1972
      %v1974 = vrot.slane %v1855, %v1973
      %v1975 = vlaneseq
      %v1976 = vshrl.u32 %v1975, 7
      %v1977 = vsub.s32 %v1919, %v1976
      %v1978 = vrot.slane %v1858, %v1977
      %v1979 = vsel %vm1924, %v1978, %v1974
      %v1980 = vlaneseq
      %v1981 = vshrl.u32 %v1980, 7
      %v1982 = vsub.s32 %v1914, %v1981
      %v1983 = vrot.slane %v1861, %v1982
      %v1984 = vlaneseq
      %v1985 = vshrl.u32 %v1984, 7
      %v1986 = vsub.s32 %v1919, %v1985
      %v1987 = vrot.slane %v1864, %v1986
      %v1988 = vsel %vm1924, %v1987, %v1983
      %v1989 = vlaneseq
      %v1990 = vshrl.u32 %v1989, 7
      %v1991 = vsub.s32 %v1914, %v1990
      %v1992 = vrot.slane %v1867, %v1991
      %v1993 = vlaneseq
      %v1994 = vshrl.u32 %v1993, 7
      %v1995 = vsub.s32 %v1919, %v1994
      %v1996 = vrot.slane %v1870, %v1995
      %v1997 = vsel %vm1924, %v1996, %v1992
      %v1998 = vlaneseq
      %v1999 = vshrl.u32 %v1998, 7
      %v2000 = vsub.s32 %v1914, %v1999
      %v2001 = vrot.slane %v1873, %v2000
      %v2002 = vlaneseq
      %v2003 = vshrl.u32 %v2002, 7
      %v2004 = vsub.s32 %v1919, %v2003
      %v2005 = vrot.slane %v1876, %v2004
      %v2006 = vsel %vm1924, %v2005, %v2001
      %v2007 = vlaneseq
      %v2008 = vshrl.u32 %v2007, 7
      %v2009 = vsub.s32 %v1914, %v2008
      %v2010 = vrot.slane %v1879, %v2009
      %v2011 = vlaneseq
      %v2012 = vshrl.u32 %v2011, 7
      %v2013 = vsub.s32 %v1919, %v2012
      %v2014 = vrot.slane %v1882, %v2013
      %v2015 = vsel %vm1924, %v2014, %v2010
      %v2016 = vlaneseq
      %v2017 = vshrl.u32 %v2016, 7
      %v2018 = vsub.s32 %v1914, %v2017
      %v2019 = vrot.slane %v1885, %v2018
      %v2020 = vlaneseq
      %v2021 = vshrl.u32 %v2020, 7
      %v2022 = vsub.s32 %v1919, %v2021
      %v2023 = vrot.slane %v1888, %v2022
      %v2024 = vsel %vm1924, %v2023, %v2019
      %v2025 = vlaneseq
      %v2026 = vshrl.u32 %v2025, 7
      %v2027 = vsub.s32 %v1914, %v2026
      %v2028 = vrot.slane %v1891, %v2027
      %v2029 = vlaneseq
      %v2030 = vshrl.u32 %v2029, 7
      %v2031 = vsub.s32 %v1919, %v2030
      %v2032 = vrot.slane %v1894, %v2031
      %v2033 = vsel %vm1924, %v2032, %v2028
      %v2034 = vlaneseq
      %v2035 = vshrl.u32 %v2034, 7
      %v2036 = vsub.s32 %v1914, %v2035
      %v2037 = vrot.slane %v1897, %v2036
      %v2038 = vlaneseq
      %v2039 = vshrl.u32 %v2038, 7
      %v2040 = vsub.s32 %v1919, %v2039
      %v2041 = vrot.slane %v1900, %v2040
      %v2042 = vsel %vm1924, %v2041, %v2037
      %v2043 = vlaneseq
      %v2044 = vshrl.u32 %v2043, 7
      %v2045 = vsub.s32 %v1914, %v2044
      %v2046 = vrot.slane %v1903, %v2045
      %v2047 = vlaneseq
      %v2048 = vshrl.u32 %v2047, 7
      %v2049 = vsub.s32 %v1919, %v2048
      %v2050 = vrot.slane %v1906, %v2049
      %v2051 = vsel %vm1924, %v2050, %v2046
      %v2052 = vlaneseq
      %v2053 = vshrl.u32 %v2052, 7
      %v2054 = vsub.s32 %v1914, %v2053
      %v2055 = vrot.slane %v1909, %v2054
      %v2056 = vlaneseq
      %v2057 = vshrl.u32 %v2056, 7
      %v2058 = vsub.s32 %v1919, %v2057
      %v2059 = vrot.slane %v1912, %v2058
      %v2060 = vsel %vm1924, %v2059, %v2055
      %vm2061 = vcmask 1042434
      %v2062 = vsel %vm2061, %v1925, %v1925
      %vm2063 = vcmask 1043459
      %v2064 = vsel %vm2063, %v1925, %v2062
      %vm2065 = vcmask 1044484
      %v2066 = vsel %vm2065, %v1925, %v2064
      %vm2067 = vcmask 1045509
      %v2068 = vsel %vm2067, %v1925, %v2066
      %vm2069 = vcmask 1046534
      %v2070 = vsel %vm2069, %v1925, %v2068
      %vm2071 = vcmask 1047559
      %v2072 = vsel %vm2071, %v1925, %v2070
      %v2073 = vsel %vm2061, %v1934, %v1934
      %v2074 = vsel %vm2063, %v1934, %v2073
      %v2075 = vsel %vm2065, %v1934, %v2074
      %v2076 = vsel %vm2067, %v1934, %v2075
      %v2077 = vsel %vm2069, %v1934, %v2076
      %v2078 = vsel %vm2071, %v1934, %v2077
      %v2079 = vsel %vm2061, %v1943, %v1943
      %v2080 = vsel %vm2063, %v1943, %v2079
      %v2081 = vsel %vm2065, %v1943, %v2080
      %v2082 = vsel %vm2067, %v1943, %v2081
      %v2083 = vsel %vm2069, %v1943, %v2082
      %v2084 = vsel %vm2071, %v1943, %v2083
      %v2085 = vsel %vm2061, %v1952, %v1952
      %v2086 = vsel %vm2063, %v1952, %v2085
      %v2087 = vsel %vm2065, %v1952, %v2086
      %v2088 = vsel %vm2067, %v1952, %v2087
      %v2089 = vsel %vm2069, %v1952, %v2088
      %v2090 = vsel %vm2071, %v1952, %v2089
      %v2091 = vsel %vm2061, %v1961, %v1961
      %v2092 = vsel %vm2063, %v1961, %v2091
      %v2093 = vsel %vm2065, %v1961, %v2092
      %v2094 = vsel %vm2067, %v1961, %v2093
      %v2095 = vsel %vm2069, %v1961, %v2094
      %v2096 = vsel %vm2071, %v1961, %v2095
      %v2097 = vsel %vm2061, %v1970, %v1970
      %v2098 = vsel %vm2063, %v1970, %v2097
      %v2099 = vsel %vm2065, %v1970, %v2098
      %v2100 = vsel %vm2067, %v1970, %v2099
      %v2101 = vsel %vm2069, %v1970, %v2100
      %v2102 = vsel %vm2071, %v1970, %v2101
      %v2103 = vsel %vm2061, %v1979, %v1979
      %v2104 = vsel %vm2063, %v1979, %v2103
      %v2105 = vsel %vm2065, %v1979, %v2104
      %v2106 = vsel %vm2067, %v1979, %v2105
      %v2107 = vsel %vm2069, %v1979, %v2106
      %v2108 = vsel %vm2071, %v1979, %v2107
      %v2109 = vsel %vm2061, %v1988, %v1988
      %v2110 = vsel %vm2063, %v1988, %v2109
      %v2111 = vsel %vm2065, %v1988, %v2110
      %v2112 = vsel %vm2067, %v1988, %v2111
      %v2113 = vsel %vm2069, %v1988, %v2112
      %v2114 = vsel %vm2071, %v1988, %v2113
      %v2115 = vsel %vm2061, %v1997, %v1997
      %v2116 = vsel %vm2063, %v1997, %v2115
      %v2117 = vsel %vm2065, %v1997, %v2116
      %v2118 = vsel %vm2067, %v1997, %v2117
      %v2119 = vsel %vm2069, %v1997, %v2118
      %v2120 = vsel %vm2071, %v1997, %v2119
      %v2121 = vsel %vm2061, %v2006, %v2006
      %v2122 = vsel %vm2063, %v2006, %v2121
      %v2123 = vsel %vm2065, %v2006, %v2122
      %v2124 = vsel %vm2067, %v2006, %v2123
      %v2125 = vsel %vm2069, %v2006, %v2124
      %v2126 = vsel %vm2071, %v2006, %v2125
      %v2127 = vsel %vm2061, %v2015, %v2015
      %v2128 = vsel %vm2063, %v2015, %v2127
      %v2129 = vsel %vm2065, %v2015, %v2128
      %v2130 = vsel %vm2067, %v2015, %v2129
      %v2131 = vsel %vm2069, %v2015, %v2130
      %v2132 = vsel %vm2071, %v2015, %v2131
      %v2133 = vsel %vm2061, %v2024, %v2024
      %v2134 = vsel %vm2063, %v2024, %v2133
      %v2135 = vsel %vm2065, %v2024, %v2134
      %v2136 = vsel %vm2067, %v2024, %v2135
      %v2137 = vsel %vm2069, %v2024, %v2136
      %v2138 = vsel %vm2071, %v2024, %v2137
      %v2139 = vsel %vm2061, %v2033, %v2033
      %v2140 = vsel %vm2063, %v2033, %v2139
      %v2141 = vsel %vm2065, %v2033, %v2140
      %v2142 = vsel %vm2067, %v2033, %v2141
      %v2143 = vsel %vm2069, %v2033, %v2142
      %v2144 = vsel %vm2071, %v2033, %v2143
      %v2145 = vsel %vm2061, %v2042, %v2042
      %v2146 = vsel %vm2063, %v2042, %v2145
      %v2147 = vsel %vm2065, %v2042, %v2146
      %v2148 = vsel %vm2067, %v2042, %v2147
      %v2149 = vsel %vm2069, %v2042, %v2148
      %v2150 = vsel %vm2071, %v2042, %v2149
      %v2151 = vsel %vm2061, %v2051, %v2051
      %v2152 = vsel %vm2063, %v2051, %v2151
      %v2153 = vsel %vm2065, %v2051, %v2152
      %v2154 = vsel %vm2067, %v2051, %v2153
      %v2155 = vsel %vm2069, %v2051, %v2154
      %v2156 = vsel %vm2071, %v2051, %v2155
      %v2157 = vsel %vm2061, %v2060, %v2060
      %v2158 = vsel %vm2063, %v2060, %v2157
      %v2159 = vsel %vm2065, %v2060, %v2158
      %v2160 = vsel %vm2067, %v2060, %v2159
      %v2161 = vsel %vm2069, %v2060, %v2160
      %v2162 = vsel %vm2071, %v2060, %v2161
      %v2179 = vmul.f32 %v1561, %v2072
      %v2180 = vmul.f32 %v1562, %v2072
      %v2181 = vmul.f32 %v1563, %v2078
      %v2182 = vmul.f32 %v1564, %v2078
      %v2183 = vmul.f32 %v1565, %v2084
      %v2184 = vmul.f32 %v1566, %v2084
      %v2185 = vmul.f32 %v1567, %v2090
      %v2186 = vmul.f32 %v1568, %v2090
      %v2187 = vmul.f32 %v1569, %v2096
      %v2188 = vmul.f32 %v1570, %v2096
      %v2189 = vmul.f32 %v1571, %v2102
      %v2190 = vmul.f32 %v1572, %v2102
      %v2191 = vmul.f32 %v1573, %v2108
      %v2192 = vmul.f32 %v1574, %v2108
      %v2193 = vmul.f32 %v1575, %v2114
      %v2194 = vmul.f32 %v1576, %v2114
      %v2195 = vmul.f32 %v1577, %v2120
      %v2196 = vmul.f32 %v1578, %v2120
      %v2197 = vmul.f32 %v1579, %v2126
      %v2198 = vmul.f32 %v1580, %v2126
      %v2199 = vmul.f32 %v1581, %v2132
      %v2200 = vmul.f32 %v1582, %v2132
      %v2201 = vmul.f32 %v1583, %v2138
      %v2202 = vmul.f32 %v1584, %v2138
      %v2203 = vmul.f32 %v1585, %v2144
      %v2204 = vmul.f32 %v1586, %v2144
      %v2205 = vmul.f32 %v1587, %v2150
      %v2206 = vmul.f32 %v1588, %v2150
      %v2207 = vmul.f32 %v1589, %v2156
      %v2208 = vmul.f32 %v1590, %v2156
      %v2209 = vmul.f32 %v1591, %v2162
      %v2210 = vmul.f32 %v1592, %v2162
      %v2211 = vmul.f32 %v2179, %v1722
      %v2212 = vmul.f32 %v2180, %v1724
      %v2213 = vmul.f32 %v2181, %v1726
      %v2214 = vmul.f32 %v2182, %v1728
      %v2215 = vmul.f32 %v2183, %v1730
      %v2216 = vmul.f32 %v2184, %v1732
      %v2217 = vmul.f32 %v2185, %v1734
      %v2218 = vmul.f32 %v2186, %v1736
      %v2219 = vmul.f32 %v2187, %v1738
      %v2220 = vmul.f32 %v2188, %v1740
      %v2221 = vmul.f32 %v2189, %v1742
      %v2222 = vmul.f32 %v2190, %v1744
      %v2223 = vmul.f32 %v2191, %v1746
      %v2224 = vmul.f32 %v2192, %v1748
      %v2225 = vmul.f32 %v2193, %v1750
      %v2226 = vmul.f32 %v2194, %v1752
      %v2227 = vmul.f32 %v2195, %v1754
      %v2228 = vmul.f32 %v2196, %v1756
      %v2229 = vmul.f32 %v2197, %v1758
      %v2230 = vmul.f32 %v2198, %v1760
      %v2231 = vmul.f32 %v2199, %v1762
      %v2232 = vmul.f32 %v2200, %v1764
      %v2233 = vmul.f32 %v2201, %v1766
      %v2234 = vmul.f32 %v2202, %v1768
      %v2235 = vmul.f32 %v2203, %v1770
      %v2236 = vmul.f32 %v2204, %v1772
      %v2237 = vmul.f32 %v2205, %v1774
      %v2238 = vmul.f32 %v2206, %v1776
      %v2239 = vmul.f32 %v2207, %v1778
      %v2240 = vmul.f32 %v2208, %v1780
      %v2241 = vmul.f32 %v2209, %v1782
      %v2242 = vmul.f32 %v2210, %v1784
      %2243 = vst.msk [vmem:[%s258] sm:$0xff] %vm326, %v2211
      %2244 = vst.msk [vmem:[%s258 + $0x8] sm:$0xff] %vm326, %v2212
      %2245 = vst.msk [vmem:[%s258 + $0x10] sm:$0xff] %vm326, %v2213
      %2246 = vst.msk [vmem:[%s258 + $0x18] sm:$0xff] %vm326, %v2214
      %2247 = vst.msk [vmem:[%s258 + $0x20] sm:$0xff] %vm326, %v2215
      %2248 = vst.msk [vmem:[%s258 + $0x28] sm:$0xff] %vm326, %v2216
      %2249 = vst.msk [vmem:[%s258 + $0x30] sm:$0xff] %vm326, %v2217
      %2250 = vst.msk [vmem:[%s258 + $0x38] sm:$0xff] %vm326, %v2218
      %2251 = vst.msk [vmem:[%s258 + $0x40] sm:$0xff] %vm326, %v2219
      %2252 = vst.msk [vmem:[%s258 + $0x48] sm:$0xff] %vm326, %v2220
      %2253 = vst.msk [vmem:[%s258 + $0x50] sm:$0xff] %vm326, %v2221
      %2254 = vst.msk [vmem:[%s258 + $0x58] sm:$0xff] %vm326, %v2222
      %2255 = vst.msk [vmem:[%s258 + $0x60] sm:$0xff] %vm326, %v2223
      %2256 = vst.msk [vmem:[%s258 + $0x68] sm:$0xff] %vm326, %v2224
      %2257 = vst.msk [vmem:[%s258 + $0x70] sm:$0xff] %vm326, %v2225
      %2258 = vst.msk [vmem:[%s258 + $0x78] sm:$0xff] %vm326, %v2226
      %2259 = vst.msk [vmem:[%s258 + $0x80] sm:$0xff] %vm326, %v2227
      %2260 = vst.msk [vmem:[%s258 + $0x88] sm:$0xff] %vm326, %v2228
      %2261 = vst.msk [vmem:[%s258 + $0x90] sm:$0xff] %vm326, %v2229
      %2262 = vst.msk [vmem:[%s258 + $0x98] sm:$0xff] %vm326, %v2230
      %2263 = vst.msk [vmem:[%s258 + $0xa0] sm:$0xff] %vm326, %v2231
      %2264 = vst.msk [vmem:[%s258 + $0xa8] sm:$0xff] %vm326, %v2232
      %2265 = vst.msk [vmem:[%s258 + $0xb0] sm:$0xff] %vm326, %v2233
      %2266 = vst.msk [vmem:[%s258 + $0xb8] sm:$0xff] %vm326, %v2234
      %2267 = vst.msk [vmem:[%s258 + $0xc0] sm:$0xff] %vm326, %v2235
      %2268 = vst.msk [vmem:[%s258 + $0xc8] sm:$0xff] %vm326, %v2236
      %2269 = vst.msk [vmem:[%s258 + $0xd0] sm:$0xff] %vm326, %v2237
      %2270 = vst.msk [vmem:[%s258 + $0xd8] sm:$0xff] %vm326, %v2238
      %2271 = vst.msk [vmem:[%s258 + $0xe0] sm:$0xff] %vm326, %v2239
      %2272 = vst.msk [vmem:[%s258 + $0xe8] sm:$0xff] %vm326, %v2240
      %2273 = vst.msk [vmem:[%s258 + $0xf0] sm:$0xff] %vm326, %v2241
      %2274 = vst.msk [vmem:[%s258 + $0xf8] sm:$0xff] %vm326, %v2242
      %s2275 = smul.u32 16, %s17
      %p2276 = scmp.lt.s32.totalorder %s2275, 31
      %s2277 = scalar_select %p2276, %s2275, 31
      %s2278 = smul.addr %s2277, 2
      %s2279 = smul.addr %s2278, 8
      %s2280 = scalar_lea.vmem %s6, %s2279
      // Predicated region
      $region45: #{tpu_custom_call.1} parent=43 // pred_check
        %p2281 = pneg %p166
      $region46: #{tpu_custom_call.1} parent=43 // pred_check_branch
        %2283 = sbr.rel (%p2281) target = $region48
      $region47: #{tpu_custom_call.1} parent=43 // pred_region
        %s2284 = smul.u32 16, %s17
      $region48: #{tpu_custom_call.1} parent=43 // pred_fallthru
        _
    $region44: #{tpu_custom_call.1} parent=5 // pred_fallthru
      _
    %p2285 = scmp.le.s32.totalorder 2, %s12
    // Predicated region
    $region49: #{tpu_custom_call.1} parent=5 // pred_check
      %p2286 = pneg %p2285
    $region50: #{tpu_custom_call.1} parent=5 // pred_check_branch
      %2288 = sbr.rel (%p2286) target = $region52
    $region51: #{tpu_custom_call.1} parent=5 // pred_region
      %s2289 = ssub.s32 %s12, 2
      // Predicated region
      $region53: #{tpu_custom_call.1} parent=51 // pred_check
        %p2290 = pneg %p172
      $region54: #{tpu_custom_call.1} parent=51 // pred_check_branch
        %2292 = sbr.rel (%p2290) target = $region56
      $region55: #{tpu_custom_call.1} parent=51 // pred_region
        %s2293 = smul.u32 16, %s18
        %p2294 = scmp.lt.s32.totalorder %s2293, 31
        %s2295 = scalar_select %p2294, %s2293, 31
        %s2296 = smul.addr %s2295, 2
        %s2297 = smul.addr %s2296, 8
        %s2298 = scalar_lea.vmem %s6, %s2297
      $region56: #{tpu_custom_call.1} parent=51 // pred_fallthru
        _
    $region52: #{tpu_custom_call.1} parent=5 // pred_fallthru
      _
  $region6: #{tpu_custom_call.1} parent=0 // loop_footer
    %s16 = sadd.s32 1, %s12
  $region7: #{tpu_custom_call.1} parent=0 // loop_footer_branch
    %11 = sbr.rel target = $region3
  $region8: #{tpu_custom_call.1} parent=0 // loop_exit
    _

</llo_original>
